<compile_context>
chip_gen: v5e
topology: v5e:2x2
jax: 0.10.0
libtpu: 0.0.40
codegen_flags: <defaults>
</compile_context>

<pallas_src>
import functools

import jax
import jax.numpy as jnp
from jax.experimental import pallas as pl
from jax.experimental.pallas import tpu as pltpu

# ---------------- configuration (small, consistent with the module) ----------------
B = 2            # batch
HIDDEN = 32      # hidden_size (channel dim)
COND = 4         # cond_channels
H = 16
W = 16
NUM_BLOCKS = 8
M1, M2 = 5, 5    # n_modes (padded path: M < H//2+1 and M < W//2+1)
LAM = 0.01       # sparsity_threshold (Softshrink lambda)
C_HALF = HIDDEN // 2
CB = C_HALF // NUM_BLOCKS

COLS_X = M2 * C_HALF          # xx (axis=-1) branch columns, mode-major
COLS_Y = M1 * C_HALF          # xy (axis=-2) branch columns, mode-major
COLS = COLS_X + COLS_Y        # 160 -> lane-dense (>=128) last dim for loads & stores

# The branch merge stacks (B*H) and (B*W) row spaces into one matrix.
assert H == W, "merged-branch layout requires square spatial dims"


# ------------------------------- Pallas kernel ---------------------------------------
def _softshrink(v, lam):
    return jnp.where(v > lam, v - lam, jnp.where(v < -lam, v + lam, jnp.zeros_like(v)))


def _spectral_kernel(xr_ref, xi_ref, er_ref, ei_ref, wr_ref, wi_ref,
                     or_ref, oi_ref, *, lam):
    # Single invocation: all retained modes of both branches at once.
    xr = xr_ref[...]          # (rows, COLS) f32 real part of truncated x_ft
    xi = xi_ref[...]          # (rows, COLS) f32 imag part
    er = er_ref[...]          # (rows, COLS) f32 conditioning scale (real)
    ei = ei_ref[...]          # (rows, COLS) f32 conditioning scale (imag)

    # complex elementwise scale:  z = x_ft * emb   (f32 on the VPU)
    zr = xr * er - xi * ei
    zi = xr * ei + xi * er

    # complex channel/mode-mixing matmul with the folded block-diagonal weight.
    # bf16 MXU inputs, f32 accumulation.
    zr_b = zr.astype(jnp.bfloat16)
    zi_b = zi.astype(jnp.bfloat16)
    wr = wr_ref[...]          # (COLS, COLS) bf16
    wi = wi_ref[...]          # (COLS, COLS) bf16
    f32 = jnp.float32
    pr = (jnp.dot(zr_b, wr, preferred_element_type=f32)
          - jnp.dot(zi_b, wi, preferred_element_type=f32))
    pi = (jnp.dot(zr_b, wi, preferred_element_type=f32)
          + jnp.dot(zi_b, wr, preferred_element_type=f32))

    # Softshrink on retained modes (zero-padded modes shrink to zero anyway).
    or_ref[...] = _softshrink(pr, lam)
    oi_ref[...] = _softshrink(pi, lam)


def spectral_mix(xr, xi, er, ei, wr, wi, lam):
    """xr/xi/er/ei: (rows, COLS) f32; wr/wi: (COLS, COLS) bf16 -> two (rows, COLS) f32."""
    rows, cols = xr.shape

    def full(shape):
        return pl.BlockSpec(shape, lambda i, _n=len(shape): (0,) * _n)

    out_sds = jax.ShapeDtypeStruct((rows, cols), jnp.float32)
    return pl.pallas_call(
        functools.partial(_spectral_kernel, lam=lam),
        grid=(1,),
        in_specs=[full(xr.shape), full(xi.shape), full(er.shape), full(ei.shape),
                  full(wr.shape), full(wi.shape)],
        out_specs=[full((rows, cols)), full((rows, cols))],
        out_shape=[out_sds, out_sds],
        compiler_params=pltpu.CompilerParams(dimension_semantics=("arbitrary",)),
    )(xr, xi, er, ei, wr, wi)


# --------------------------------- glue (plain JAX) ----------------------------------
def _fold_modes_blockdiag(w_c):
    """(nb, ci, co, m) complex -> (m*nb*ci, m*nb*co) mode-and-block block-diagonal."""
    nb, ci, co, m = w_c.shape
    wt = jnp.transpose(w_c, (3, 0, 1, 2))                          # (m, nb, ci, co)
    eye_b = jnp.eye(nb, dtype=w_c.dtype)
    per_mode = jnp.einsum('mnio,nk->mniko', wt, eye_b).reshape(m, nb * ci, nb * co)
    eye_m = jnp.eye(m, dtype=w_c.dtype)
    full = jnp.einsum('mio,ml->milo', per_mode, eye_m)              # (m, C, m, C)
    return full.reshape(m * nb * ci, m * nb * co)


def fourier_block_forward(x, emb, params):
    bsz = emb.shape[0]

    # FreqLinear conditioning (tiny) in plain JAX.
    h1 = emb @ params['fl_w1'] + params['fl_b1']
    h2 = emb @ params['fl_w2'] + params['fl_b2']
    h1 = h1.reshape(bsz, M1, 2)
    emb1 = (h1[..., 0] + 1j * h1[..., 1]).astype(jnp.complex64)
    h2 = h2.reshape(bsz, M2, 2)
    emb2 = (h2[..., 0] + 1j * h2[..., 1]).astype(jnp.complex64)

    xx, xy = jnp.split(x, 2, axis=1)

    # Forward FFTs (glue).
    xft_x = jnp.fft.rfft(xx, axis=-1, norm='ortho')                 # (B, C, H, Wf)
    xft_y = jnp.fft.rfft(xy, axis=-2, norm='ortho')                 # (B, C, Hf, W)
    nf_x = xft_x.shape[-1]
    nf_y = xft_y.shape[-2]

    # Retained modes, laid out mode-major along a single lane-dense last dim,
    # both branches concatenated (their row spaces are both B*16).
    xt_x = jnp.transpose(xft_x[..., :M2], (0, 2, 3, 1)).reshape(bsz, H, COLS_X)
    xt_y = jnp.transpose(xft_y[..., :M1, :], (0, 3, 2, 1)).reshape(bsz, W, COLS_Y)
    x_cat = jnp.concatenate([xt_x, xt_y], axis=-1).reshape(bsz * H, COLS)
    xr = jnp.real(x_cat).astype(jnp.float32)
    xi = jnp.imag(x_cat).astype(jnp.float32)

    # Conditioning broadcast to the same lane-dense layout (tiny, ~20 KB per part).
    e_cat = jnp.concatenate([jnp.repeat(emb2, C_HALF, axis=1),
                             jnp.repeat(emb1, C_HALF, axis=1)], axis=1)   # (B, COLS)
    e_full = jnp.broadcast_to(e_cat[:, None, :], (bsz, H, COLS)).reshape(bsz * H, COLS)
    er = jnp.real(e_full).astype(jnp.float32)
    ei = jnp.imag(e_full).astype(jnp.float32)

    # One Pallas call for the whole spectral hot path.
    outr, outi = spectral_mix(xr, xi, er, ei, params['w_r'], params['w_i'], LAM)
    out_c = (outr + 1j * outi).astype(jnp.complex64).reshape(bsz, H, COLS)

    # Split branches back, pad the dropped frequencies with zeros, inverse FFT.
    o_x = jnp.transpose(out_c[:, :, :COLS_X].reshape(bsz, H, M2, C_HALF), (0, 3, 1, 2))
    o_y = jnp.transpose(out_c[:, :, COLS_X:].reshape(bsz, W, M1, C_HALF), (0, 3, 2, 1))
    out_ft_x = jnp.pad(o_x, ((0, 0), (0, 0), (0, 0), (0, nf_x - M2)))
    out_ft_y = jnp.pad(o_y, ((0, 0), (0, 0), (0, nf_y - M1), (0, 0)))
    xx_o = jnp.fft.irfft(out_ft_x, n=W, axis=-1, norm='ortho')
    xy_o = jnp.fft.irfft(out_ft_y, n=H, axis=-2, norm='ortho')
    return jnp.concatenate([xx_o, xy_o], axis=1)


# --------------------------------- parameter init ------------------------------------
def init_params(key):
    k1, k2, k3, k4 = jax.random.split(key, 4)
    # kaiming_normal_ on the real part only (imag stays 0, as in reset_parameters)
    std1 = (2.0 / (CB * CB * M1)) ** 0.5
    std2 = (2.0 / (CB * CB * M2)) ** 0.5
    w1_r = std1 * jax.random.normal(k1, (NUM_BLOCKS, CB, CB, M1), jnp.float32)
    w2_r = std2 * jax.random.normal(k2, (NUM_BLOCKS, CB, CB, M2), jnp.float32)
    w1_i = jnp.zeros_like(w1_r)
    w2_i = jnp.zeros_like(w2_r)
    w1_c = (w1_r + 1j * w1_i).astype(jnp.complex64)
    w2_c = (w2_r + 1j * w2_i).astype(jnp.complex64)

    # Fold num_blocks, modes, and both branches into one (COLS, COLS) block-diagonal
    # weight: columns [0, COLS_X) are the xx/axis=-1 branch (weight_2, emb2),
    # columns [COLS_X, COLS) are the xy/axis=-2 branch (weight_1, emb1).
    # (At these toy sizes the extra zero-FLOPs are free; at realistic channel counts
    #  keep the block dimension batched instead of folding dense.)
    w_full = jnp.zeros((COLS, COLS), jnp.complex64)
    w_full = w_full.at[:COLS_X, :COLS_X].set(_fold_modes_blockdiag(w2_c))
    w_full = w_full.at[COLS_X:, COLS_X:].set(_fold_modes_blockdiag(w1_c))

    scale1 = 1.0 / (COND + 2 * M1)
    scale2 = 1.0 / (COND + 2 * M2)
    fl_w1 = scale1 * jax.random.normal(k3, (COND, 2 * M1), jnp.float32)
    fl_w2 = scale2 * jax.random.normal(k4, (COND, 2 * M2), jnp.float32)
    fl_b1 = jnp.zeros((1, 2 * M1), jnp.float32)
    fl_b2 = jnp.zeros((1, 2 * M2), jnp.float32)

    params = dict(
        fl_w1=fl_w1, fl_b1=fl_b1, fl_w2=fl_w2, fl_b2=fl_b2,
        w_r=jnp.real(w_full).astype(jnp.bfloat16),   # bf16 MXU operands
        w_i=jnp.imag(w_full).astype(jnp.bfloat16),
    )
    raw = (w1_r, w1_i, w2_r, w2_i)
    return params, raw


# --------------------------------- pure-JAX reference --------------------------------
def _softshrink_c(z, lam):
    return _softshrink(jnp.real(z), lam) + 1j * _softshrink(jnp.imag(z), lam)


def reference_forward(x, emb, params, w1_r, w1_i, w2_r, w2_i):
    bsz = emb.shape[0]
    h1 = emb @ params['fl_w1'] + params['fl_b1']
    h2 = emb @ params['fl_w2'] + params['fl_b2']
    h1 = h1.reshape(bsz, M1, 2)
    emb1 = h1[..., 0] + 1j * h1[..., 1]
    h2 = h2.reshape(bsz, M2, 2)
    emb2 = h2[..., 0] + 1j * h2[..., 1]
    xx, xy = jnp.split(x, 2, axis=1)
    w1c = w1_r + 1j * w1_i
    w2c = w2_r + 1j * w2_i

    # xx: dim=-1, weight_2, emb2
    x_ft = jnp.fft.rfft(xx, axis=-1, norm='ortho')
    bs, c, hh, wf = x_ft.shape
    x_ft = x_ft.reshape(bs, NUM_BLOCKS, c // NUM_BLOCKS, hh, wf)
    z = x_ft[..., :M2] * emb2[:, None, None, None, :]
    o = jnp.einsum('bnixy,nioy->bnoxy', z, w2c)
    out_ft = jnp.zeros(x_ft.shape, jnp.complex64).at[..., :M2].set(o)
    out_ft = _softshrink_c(out_ft.reshape(bs, c, hh, wf), LAM)
    xx_o = jnp.fft.irfft(out_ft, n=W, axis=-1, norm='ortho')

    # xy: dim=-2, weight_1, emb1
    y_ft = jnp.fft.rfft(xy, axis=-2, norm='ortho')
    bs, c, hf, ww = y_ft.shape
    y_ft = y_ft.reshape(bs, NUM_BLOCKS, c // NUM_BLOCKS, hf, ww)
    z = y_ft[..., :M1, :] * emb1[:, None, None, :, None]
    o = jnp.einsum('bnixy,niox->bnoxy', z, w1c)
    out_ft = jnp.zeros(y_ft.shape, jnp.complex64).at[..., :M1, :].set(o)
    out_ft = _softshrink_c(out_ft.reshape(bs, c, hf, ww), LAM)
    xy_o = jnp.fft.irfft(out_ft, n=H, axis=-2, norm='ortho')

    return jnp.concatenate([xx_o, xy_o], axis=1)


# ------------------------------------- main -------------------------------------------
if __name__ == "__main__":
    key = jax.random.PRNGKey(0)
    kx, ke, kp = jax.random.split(key, 3)
    x = jax.random.normal(kx, (B, HIDDEN, H, W), jnp.float32)
    emb = jax.random.normal(ke, (B, COND), jnp.float32)
    params, raw = init_params(kp)

    fwd = jax.jit(lambda xx, ee: fourier_block_forward(xx, ee, params))
    out = jax.block_until_ready(fwd(x, emb))

    ref = reference_forward(x, emb, params, *raw)
    assert out.shape == (B, HIDDEN, H, W), out.shape
    max_err = float(jnp.max(jnp.abs(out - ref)))
    assert jnp.allclose(out, ref, atol=2e-2, rtol=2e-2), f"max err {max_err}"
    print("KERNEL_OK")
</pallas_src>

<mosaic_0001>
module attributes {stable_mosaic.version = 11 : i64} {
  func.func @_spectral_kernel(%arg0: i32, %arg1: memref<32x160xf32, #tpu.memory_space<vmem>>, %arg2: memref<32x160xf32, #tpu.memory_space<vmem>>, %arg3: memref<32x160xf32, #tpu.memory_space<vmem>>, %arg4: memref<32x160xf32, #tpu.memory_space<vmem>>, %arg5: memref<160x160xbf16, #tpu.memory_space<vmem>>, %arg6: memref<160x160xbf16, #tpu.memory_space<vmem>>, %arg7: memref<32x160xf32, #tpu.memory_space<vmem>>, %arg8: memref<32x160xf32, #tpu.memory_space<vmem>>) attributes {dimension_semantics = [#tpu.dimension_semantics<arbitrary>], iteration_bounds = array<i64: 1>, scalar_prefetch = 0 : i64, scratch_operands = 0 : i64, tpu.core_type = #tpu.core_type<tc>, window_params = [{pipeline_mode = #tpu.pipeline_mode<synchronous>, transform_indices = @transform_0, window_bounds = array<i64: 32, 160>}, {pipeline_mode = #tpu.pipeline_mode<synchronous>, transform_indices = @transform_1, window_bounds = array<i64: 32, 160>}, {pipeline_mode = #tpu.pipeline_mode<synchronous>, transform_indices = @transform_2, window_bounds = array<i64: 32, 160>}, {pipeline_mode = #tpu.pipeline_mode<synchronous>, transform_indices = @transform_3, window_bounds = array<i64: 32, 160>}, {pipeline_mode = #tpu.pipeline_mode<synchronous>, transform_indices = @transform_4, window_bounds = array<i64: 160, 160>}, {pipeline_mode = #tpu.pipeline_mode<synchronous>, transform_indices = @transform_5, window_bounds = array<i64: 160, 160>}, {pipeline_mode = #tpu.pipeline_mode<synchronous>, transform_indices = @transform_6, window_bounds = array<i64: 32, 160>}, {pipeline_mode = #tpu.pipeline_mode<synchronous>, transform_indices = @transform_7, window_bounds = array<i64: 32, 160>}]} {
    %c0 = arith.constant 0 : index
    %c0_0 = arith.constant 0 : index
    %0 = vector.load %arg1[%c0, %c0_0] : memref<32x160xf32, #tpu.memory_space<vmem>>, vector<32x160xf32>
    %c0_1 = arith.constant 0 : index
    %c0_2 = arith.constant 0 : index
    %1 = vector.load %arg2[%c0_1, %c0_2] : memref<32x160xf32, #tpu.memory_space<vmem>>, vector<32x160xf32>
    %c0_3 = arith.constant 0 : index
    %c0_4 = arith.constant 0 : index
    %2 = vector.load %arg3[%c0_3, %c0_4] : memref<32x160xf32, #tpu.memory_space<vmem>>, vector<32x160xf32>
    %c0_5 = arith.constant 0 : index
    %c0_6 = arith.constant 0 : index
    %3 = vector.load %arg4[%c0_5, %c0_6] : memref<32x160xf32, #tpu.memory_space<vmem>>, vector<32x160xf32>
    %4 = arith.mulf %0, %2 : vector<32x160xf32>
    %5 = arith.mulf %1, %3 : vector<32x160xf32>
    %6 = arith.subf %4, %5 : vector<32x160xf32>
    %7 = arith.mulf %0, %3 : vector<32x160xf32>
    %8 = arith.mulf %1, %2 : vector<32x160xf32>
    %9 = arith.addf %7, %8 : vector<32x160xf32>
    %10 = arith.truncf %6 : vector<32x160xf32> to vector<32x160xbf16>
    %11 = arith.truncf %9 : vector<32x160xf32> to vector<32x160xbf16>
    %c0_7 = arith.constant 0 : index
    %c0_8 = arith.constant 0 : index
    %12 = vector.load %arg5[%c0_7, %c0_8] : memref<160x160xbf16, #tpu.memory_space<vmem>>, vector<160x160xbf16>
    %c0_9 = arith.constant 0 : index
    %c0_10 = arith.constant 0 : index
    %13 = vector.load %arg6[%c0_9, %c0_10] : memref<160x160xbf16, #tpu.memory_space<vmem>>, vector<160x160xbf16>
    %cst = arith.constant dense<0.000000e+00> : vector<32x160xf32>
    %14 = tpu.matmul %10, %12, %cst {dimension_numbers = #tpu.dot_dimension_numbers<[1], [0], [0], [1], [0, 0, 1, 1], [], []>} : vector<32x160xbf16>, vector<160x160xbf16>, vector<32x160xf32> -> vector<32x160xf32>
    %cst_11 = arith.constant dense<0.000000e+00> : vector<32x160xf32>
    %15 = tpu.matmul %11, %13, %cst_11 {dimension_numbers = #tpu.dot_dimension_numbers<[1], [0], [0], [1], [0, 0, 1, 1], [], []>} : vector<32x160xbf16>, vector<160x160xbf16>, vector<32x160xf32> -> vector<32x160xf32>
    %16 = arith.subf %14, %15 : vector<32x160xf32>
    %cst_12 = arith.constant dense<0.000000e+00> : vector<32x160xf32>
    %17 = tpu.matmul %10, %13, %cst_12 {dimension_numbers = #tpu.dot_dimension_numbers<[1], [0], [0], [1], [0, 0, 1, 1], [], []>} : vector<32x160xbf16>, vector<160x160xbf16>, vector<32x160xf32> -> vector<32x160xf32>
    %cst_13 = arith.constant dense<0.000000e+00> : vector<32x160xf32>
    %18 = tpu.matmul %11, %12, %cst_13 {dimension_numbers = #tpu.dot_dimension_numbers<[1], [0], [0], [1], [0, 0, 1, 1], [], []>} : vector<32x160xbf16>, vector<160x160xbf16>, vector<32x160xf32> -> vector<32x160xf32>
    %19 = arith.addf %17, %18 : vector<32x160xf32>
    %cst_14 = arith.constant 0.00999999977 : f32
    %20 = vector.broadcast %cst_14 : f32 to vector<32x160xf32>
    %21 = arith.cmpf ogt, %16, %20 : vector<32x160xf32>
    %cst_15 = arith.constant 0.00999999977 : f32
    %22 = vector.broadcast %cst_15 : f32 to vector<32x160xf32>
    %23 = arith.subf %16, %22 : vector<32x160xf32>
    %cst_16 = arith.constant -0.00999999977 : f32
    %24 = vector.broadcast %cst_16 : f32 to vector<32x160xf32>
    %25 = arith.cmpf olt, %16, %24 : vector<32x160xf32>
    %cst_17 = arith.constant 0.00999999977 : f32
    %26 = vector.broadcast %cst_17 : f32 to vector<32x160xf32>
    %27 = arith.addf %16, %26 : vector<32x160xf32>
    %cst_18 = arith.constant 0.000000e+00 : f32
    %28 = vector.broadcast %cst_18 : f32 to vector<32x160xf32>
    %29 = arith.select %25, %27, %28 : vector<32x160xi1>, vector<32x160xf32>
    %30 = arith.select %21, %23, %29 : vector<32x160xi1>, vector<32x160xf32>
    %c0_19 = arith.constant 0 : index
    %c0_20 = arith.constant 0 : index
    %31 = vector.load %arg7[%c0_19, %c0_20] : memref<32x160xf32, #tpu.memory_space<vmem>>, vector<32x160xf32>
    tpu.vector_store %arg7[%c0_19, %c0_20], %30 {strides = array<i32>} : memref<32x160xf32, #tpu.memory_space<vmem>>, vector<32x160xf32>,
    %cst_21 = arith.constant 0.00999999977 : f32
    %32 = vector.broadcast %cst_21 : f32 to vector<32x160xf32>
    %33 = arith.cmpf ogt, %19, %32 : vector<32x160xf32>
    %cst_22 = arith.constant 0.00999999977 : f32
    %34 = vector.broadcast %cst_22 : f32 to vector<32x160xf32>
    %35 = arith.subf %19, %34 : vector<32x160xf32>
    %cst_23 = arith.constant -0.00999999977 : f32
    %36 = vector.broadcast %cst_23 : f32 to vector<32x160xf32>
    %37 = arith.cmpf olt, %19, %36 : vector<32x160xf32>
    %cst_24 = arith.constant 0.00999999977 : f32
    %38 = vector.broadcast %cst_24 : f32 to vector<32x160xf32>
    %39 = arith.addf %19, %38 : vector<32x160xf32>
    %cst_25 = arith.constant 0.000000e+00 : f32
    %40 = vector.broadcast %cst_25 : f32 to vector<32x160xf32>
    %41 = arith.select %37, %39, %40 : vector<32x160xi1>, vector<32x160xf32>
    %42 = arith.select %33, %35, %41 : vector<32x160xi1>, vector<32x160xf32>
    %c0_26 = arith.constant 0 : index
    %c0_27 = arith.constant 0 : index
    %43 = vector.load %arg8[%c0_26, %c0_27] : memref<32x160xf32, #tpu.memory_space<vmem>>, vector<32x160xf32>
    tpu.vector_store %arg8[%c0_26, %c0_27], %42 {strides = array<i32>} : memref<32x160xf32, #tpu.memory_space<vmem>>, vector<32x160xf32>,
    return
  }
  func.func @transform_0(%arg0: i32) -> (i32, i32) {
    %c0_i32 = arith.constant 0 : i32
    %c0_i32_0 = arith.constant 0 : i32
    %c0_i32_1 = arith.constant 0 : i32
    return %c0_i32, %c0_i32_0 : i32, i32
  }
  func.func @transform_1(%arg0: i32) -> (i32, i32) {
    %c0_i32 = arith.constant 0 : i32
    %c0_i32_0 = arith.constant 0 : i32
    %c0_i32_1 = arith.constant 0 : i32
    return %c0_i32, %c0_i32_0 : i32, i32
  }
  func.func @transform_2(%arg0: i32) -> (i32, i32) {
    %c0_i32 = arith.constant 0 : i32
    %c0_i32_0 = arith.constant 0 : i32
    %c0_i32_1 = arith.constant 0 : i32
    return %c0_i32, %c0_i32_0 : i32, i32
  }
  func.func @transform_3(%arg0: i32) -> (i32, i32) {
    %c0_i32 = arith.constant 0 : i32
    %c0_i32_0 = arith.constant 0 : i32
    %c0_i32_1 = arith.constant 0 : i32
    return %c0_i32, %c0_i32_0 : i32, i32
  }
  func.func @transform_4(%arg0: i32) -> (i32, i32) {
    %c0_i32 = arith.constant 0 : i32
    %c0_i32_0 = arith.constant 0 : i32
    %c0_i32_1 = arith.constant 0 : i32
    return %c0_i32, %c0_i32_0 : i32, i32
  }
  func.func @transform_5(%arg0: i32) -> (i32, i32) {
    %c0_i32 = arith.constant 0 : i32
    %c0_i32_0 = arith.constant 0 : i32
    %c0_i32_1 = arith.constant 0 : i32
    return %c0_i32, %c0_i32_0 : i32, i32
  }
  func.func @transform_6(%arg0: i32) -> (i32, i32) {
    %c0_i32 = arith.constant 0 : i32
    %c0_i32_0 = arith.constant 0 : i32
    %c0_i32_1 = arith.constant 0 : i32
    return %c0_i32, %c0_i32_0 : i32, i32
  }
  func.func @transform_7(%arg0: i32) -> (i32, i32) {
    %c0_i32 = arith.constant 0 : i32
    %c0_i32_0 = arith.constant 0 : i32
    %c0_i32_1 = arith.constant 0 : i32
    return %c0_i32, %c0_i32_0 : i32, i32
  }
}

</mosaic_0001>

<llo_original>
// kernel: reverse.4
$region0: #{reverse.4}
  %s0 = inlined_call_operand.vmem [shape: f32[2,16,16,7], index: 0, kind: input, shape index: {}]
  %s1 = inlined_call_operand.vmem [shape: f32[2,16,16,7], index: 1, kind: output, shape index: {}]
  %v2 = vlaneseq
  %v3 = vsub.s32 6, %v2
  %4 = vset.pattern.permute.xlu0 %v3
  $region1: #{reverse.4} parent=0
    #allocation0 [shape = 'u8[262144]{0}', space=vmem, size = 0x40000, scoped, tag = 'operand span for operand 0']
    #allocation1 [shape = 'u8[262144]{0}', space=vmem, size = 0x40000, scoped, tag = 'operand span for operand 1']
    // Predicated region
    $region2: #{reverse.4} parent=1 // pred_check
      _
    $region3: #{reverse.4} parent=1 // pred_check_branch
      %6 = sbr.rel (0) target = $region5
    $region4: #{reverse.4} parent=1 // pred_region
      // Predicated region
      $region6: #{reverse.4} parent=4 // pred_check
        _
      $region7: #{reverse.4} parent=4 // pred_check_branch
        %8 = sbr.rel (0) target = $region9
      $region8: #{reverse.4} parent=4 // pred_region
        // Predicated region
        $region21: #{reverse.4} parent=8 // pred_check
          _
        $region22: #{reverse.4} parent=8 // pred_check_branch
          %150 = sbr.rel (0) target = $region24
        $region23: #{reverse.4} parent=8 // pred_region
          loop: start=0, step=1, limit=1
          $region25: #{reverse.4} parent=23 // loop_pre_header
            _
          $region26: #{reverse.4} parent=23 // loop_header
            %s152 = sphi 0, %s156
            %p153 = scmp.ge.s32.totalorder %s152, 1
            %s157 = sphi %s0, %s0
            %s158 = sphi [#allocation0], [#allocation0]
          $region27: #{reverse.4} parent=23 // loop_header_branch
            %155 = sbr.rel (%p153) target = $region31
          $region28: #{reverse.4} parent=23 // loop_body
            %v159 = vld [vmem:[%s157] sm:$0xff]
            %160 = vst [vmem:[%s158] sm:$0xff] %v159
            %v161 = vld [vmem:[%s157 + $0x8] sm:$0xff]
            %162 = vst [vmem:[%s158 + $0x8] sm:$0xff] %v161
            %v163 = vld [vmem:[%s157 + $0x10] sm:$0xff]
            %164 = vst [vmem:[%s158 + $0x10] sm:$0xff] %v163
            %v165 = vld [vmem:[%s157 + $0x18] sm:$0xff]
            %166 = vst [vmem:[%s158 + $0x18] sm:$0xff] %v165
            %v167 = vld [vmem:[%s157 + $0x20] sm:$0xff]
            %168 = vst [vmem:[%s158 + $0x20] sm:$0xff] %v167
            %v169 = vld [vmem:[%s157 + $0x28] sm:$0xff]
            %170 = vst [vmem:[%s158 + $0x28] sm:$0xff] %v169
            %v171 = vld [vmem:[%s157 + $0x30] sm:$0xff]
            %172 = vst [vmem:[%s158 + $0x30] sm:$0xff] %v171
            %v173 = vld [vmem:[%s157 + $0x38] sm:$0xff]
            %174 = vst [vmem:[%s158 + $0x38] sm:$0xff] %v173
            %v175 = vld [vmem:[%s157 + $0x40] sm:$0xff]
            %176 = vst [vmem:[%s158 + $0x40] sm:$0xff] %v175
            %v177 = vld [vmem:[%s157 + $0x48] sm:$0xff]
            %178 = vst [vmem:[%s158 + $0x48] sm:$0xff] %v177
            %v179 = vld [vmem:[%s157 + $0x50] sm:$0xff]
            %180 = vst [vmem:[%s158 + $0x50] sm:$0xff] %v179
            %v181 = vld [vmem:[%s157 + $0x58] sm:$0xff]
            %182 = vst [vmem:[%s158 + $0x58] sm:$0xff] %v181
            %v183 = vld [vmem:[%s157 + $0x60] sm:$0xff]
            %184 = vst [vmem:[%s158 + $0x60] sm:$0xff] %v183
            %v185 = vld [vmem:[%s157 + $0x68] sm:$0xff]
            %186 = vst [vmem:[%s158 + $0x68] sm:$0xff] %v185
            %v187 = vld [vmem:[%s157 + $0x70] sm:$0xff]
            %188 = vst [vmem:[%s158 + $0x70] sm:$0xff] %v187
            %v189 = vld [vmem:[%s157 + $0x78] sm:$0xff]
            %190 = vst [vmem:[%s158 + $0x78] sm:$0xff] %v189
            %v191 = vld [vmem:[%s157 + $0x80] sm:$0xff]
            %192 = vst [vmem:[%s158 + $0x80] sm:$0xff] %v191
            %v193 = vld [vmem:[%s157 + $0x88] sm:$0xff]
            %194 = vst [vmem:[%s158 + $0x88] sm:$0xff] %v193
            %v195 = vld [vmem:[%s157 + $0x90] sm:$0xff]
            %196 = vst [vmem:[%s158 + $0x90] sm:$0xff] %v195
            %v197 = vld [vmem:[%s157 + $0x98] sm:$0xff]
            %198 = vst [vmem:[%s158 + $0x98] sm:$0xff] %v197
            %v199 = vld [vmem:[%s157 + $0xa0] sm:$0xff]
            %200 = vst [vmem:[%s158 + $0xa0] sm:$0xff] %v199
            %v201 = vld [vmem:[%s157 + $0xa8] sm:$0xff]
            %202 = vst [vmem:[%s158 + $0xa8] sm:$0xff] %v201
            %v203 = vld [vmem:[%s157 + $0xb0] sm:$0xff]
            %204 = vst [vmem:[%s158 + $0xb0] sm:$0xff] %v203
            %v205 = vld [vmem:[%s157 + $0xb8] sm:$0xff]
            %206 = vst [vmem:[%s158 + $0xb8] sm:$0xff] %v205
            %v207 = vld [vmem:[%s157 + $0xc0] sm:$0xff]
            %208 = vst [vmem:[%s158 + $0xc0] sm:$0xff] %v207
            %v209 = vld [vmem:[%s157 + $0xc8] sm:$0xff]
            %210 = vst [vmem:[%s158 + $0xc8] sm:$0xff] %v209
            %v211 = vld [vmem:[%s157 + $0xd0] sm:$0xff]
            %212 = vst [vmem:[%s158 + $0xd0] sm:$0xff] %v211
            %v213 = vld [vmem:[%s157 + $0xd8] sm:$0xff]
            %214 = vst [vmem:[%s158 + $0xd8] sm:$0xff] %v213
            %v215 = vld [vmem:[%s157 + $0xe0] sm:$0xff]
            %216 = vst [vmem:[%s158 + $0xe0] sm:$0xff] %v215
            %v217 = vld [vmem:[%s157 + $0xe8] sm:$0xff]
            %218 = vst [vmem:[%s158 + $0xe8] sm:$0xff] %v217
            %v219 = vld [vmem:[%s157 + $0xf0] sm:$0xff]
            %220 = vst [vmem:[%s158 + $0xf0] sm:$0xff] %v219
            %v221 = vld [vmem:[%s157 + $0xf8] sm:$0xff]
            %222 = vst [vmem:[%s158 + $0xf8] sm:$0xff] %v221
            %v223 = vld [vmem:[%s157 + $0x100] sm:$0xff]
            %224 = vst [vmem:[%s158 + $0x100] sm:$0xff] %v223
            %v225 = vld [vmem:[%s157 + $0x108] sm:$0xff]
            %226 = vst [vmem:[%s158 + $0x108] sm:$0xff] %v225
            %v227 = vld [vmem:[%s157 + $0x110] sm:$0xff]
            %228 = vst [vmem:[%s158 + $0x110] sm:$0xff] %v227
            %v229 = vld [vmem:[%s157 + $0x118] sm:$0xff]
            %230 = vst [vmem:[%s158 + $0x118] sm:$0xff] %v229
            %v231 = vld [vmem:[%s157 + $0x120] sm:$0xff]
            %232 = vst [vmem:[%s158 + $0x120] sm:$0xff] %v231
            %v233 = vld [vmem:[%s157 + $0x128] sm:$0xff]
            %234 = vst [vmem:[%s158 + $0x128] sm:$0xff] %v233
            %v235 = vld [vmem:[%s157 + $0x130] sm:$0xff]
            %236 = vst [vmem:[%s158 + $0x130] sm:$0xff] %v235
            %v237 = vld [vmem:[%s157 + $0x138] sm:$0xff]
            %238 = vst [vmem:[%s158 + $0x138] sm:$0xff] %v237
            %v239 = vld [vmem:[%s157 + $0x140] sm:$0xff]
            %240 = vst [vmem:[%s158 + $0x140] sm:$0xff] %v239
            %v241 = vld [vmem:[%s157 + $0x148] sm:$0xff]
            %242 = vst [vmem:[%s158 + $0x148] sm:$0xff] %v241
            %v243 = vld [vmem:[%s157 + $0x150] sm:$0xff]
            %244 = vst [vmem:[%s158 + $0x150] sm:$0xff] %v243
            %v245 = vld [vmem:[%s157 + $0x158] sm:$0xff]
            %246 = vst [vmem:[%s158 + $0x158] sm:$0xff] %v245
            %v247 = vld [vmem:[%s157 + $0x160] sm:$0xff]
            %248 = vst [vmem:[%s158 + $0x160] sm:$0xff] %v247
            %v249 = vld [vmem:[%s157 + $0x168] sm:$0xff]
            %250 = vst [vmem:[%s158 + $0x168] sm:$0xff] %v249
            %v251 = vld [vmem:[%s157 + $0x170] sm:$0xff]
            %252 = vst [vmem:[%s158 + $0x170] sm:$0xff] %v251
            %v253 = vld [vmem:[%s157 + $0x178] sm:$0xff]
            %254 = vst [vmem:[%s158 + $0x178] sm:$0xff] %v253
            %v255 = vld [vmem:[%s157 + $0x180] sm:$0xff]
            %256 = vst [vmem:[%s158 + $0x180] sm:$0xff] %v255
            %v257 = vld [vmem:[%s157 + $0x188] sm:$0xff]
            %258 = vst [vmem:[%s158 + $0x188] sm:$0xff] %v257
            %v259 = vld [vmem:[%s157 + $0x190] sm:$0xff]
            %260 = vst [vmem:[%s158 + $0x190] sm:$0xff] %v259
            %v261 = vld [vmem:[%s157 + $0x198] sm:$0xff]
            %262 = vst [vmem:[%s158 + $0x198] sm:$0xff] %v261
            %v263 = vld [vmem:[%s157 + $0x1a0] sm:$0xff]
            %264 = vst [vmem:[%s158 + $0x1a0] sm:$0xff] %v263
            %v265 = vld [vmem:[%s157 + $0x1a8] sm:$0xff]
            %266 = vst [vmem:[%s158 + $0x1a8] sm:$0xff] %v265
            %v267 = vld [vmem:[%s157 + $0x1b0] sm:$0xff]
            %268 = vst [vmem:[%s158 + $0x1b0] sm:$0xff] %v267
            %v269 = vld [vmem:[%s157 + $0x1b8] sm:$0xff]
            %270 = vst [vmem:[%s158 + $0x1b8] sm:$0xff] %v269
            %v271 = vld [vmem:[%s157 + $0x1c0] sm:$0xff]
            %272 = vst [vmem:[%s158 + $0x1c0] sm:$0xff] %v271
            %v273 = vld [vmem:[%s157 + $0x1c8] sm:$0xff]
            %274 = vst [vmem:[%s158 + $0x1c8] sm:$0xff] %v273
            %v275 = vld [vmem:[%s157 + $0x1d0] sm:$0xff]
            %276 = vst [vmem:[%s158 + $0x1d0] sm:$0xff] %v275
            %v277 = vld [vmem:[%s157 + $0x1d8] sm:$0xff]
            %278 = vst [vmem:[%s158 + $0x1d8] sm:$0xff] %v277
            %v279 = vld [vmem:[%s157 + $0x1e0] sm:$0xff]
            %280 = vst [vmem:[%s158 + $0x1e0] sm:$0xff] %v279
            %v281 = vld [vmem:[%s157 + $0x1e8] sm:$0xff]
            %282 = vst [vmem:[%s158 + $0x1e8] sm:$0xff] %v281
            %v283 = vld [vmem:[%s157 + $0x1f0] sm:$0xff]
            %284 = vst [vmem:[%s158 + $0x1f0] sm:$0xff] %v283
            %v285 = vld [vmem:[%s157 + $0x1f8] sm:$0xff]
            %286 = vst [vmem:[%s158 + $0x1f8] sm:$0xff] %v285
          $region29: #{reverse.4} parent=23 // loop_footer
            %s156 = sadd.s32 1, %s152
          $region30: #{reverse.4} parent=23 // loop_footer_branch
            %151 = sbr.rel target = $region26
          $region31: #{reverse.4} parent=23 // loop_exit
            _
        $region24: #{reverse.4} parent=8 // pred_fallthru
          _
        // Predicated region
        $region32: #{reverse.4} parent=8 // pred_check
          _
        $region33: #{reverse.4} parent=8 // pred_check_branch
          %288 = sbr.rel target = $region35
        $region34: #{reverse.4} parent=8 // pred_region
          _
        $region35: #{reverse.4} parent=8 // pred_fallthru
          _
      $region9: #{reverse.4} parent=4 // pred_fallthru
        _
      // Predicated region
      $region10: #{reverse.4} parent=4 // pred_check
        _
      $region11: #{reverse.4} parent=4 // pred_check_branch
        %10 = sbr.rel target = $region13
      $region12: #{reverse.4} parent=4 // pred_region
        %s12 = ssub.s32 256, 1
        loop: start=0, step=1, limit=1
        $region14: #{reverse.4} parent=12 // loop_pre_header
          _
        $region15: #{reverse.4} parent=12 // loop_header
          %s14 = sphi 0, %s18
          %p15 = scmp.ge.s32.totalorder %s14, 1
          %s19 = sphi %s0, %s0
          %s20 = sphi [#allocation0], [#allocation0]
        $region16: #{reverse.4} parent=12 // loop_header_branch
          %17 = sbr.rel (%p15) target = $region20
        $region17: #{reverse.4} parent=12 // loop_body
          %v21 = vld [vmem:[%s19] sm:%s12]
          %22 = vst [vmem:[%s20] sm:%s12] %v21
          %v23 = vld [vmem:[%s19 + $0x8] sm:%s12]
          %24 = vst [vmem:[%s20 + $0x8] sm:%s12] %v23
          %v25 = vld [vmem:[%s19 + $0x10] sm:%s12]
          %26 = vst [vmem:[%s20 + $0x10] sm:%s12] %v25
          %v27 = vld [vmem:[%s19 + $0x18] sm:%s12]
          %28 = vst [vmem:[%s20 + $0x18] sm:%s12] %v27
          %v29 = vld [vmem:[%s19 + $0x20] sm:%s12]
          %30 = vst [vmem:[%s20 + $0x20] sm:%s12] %v29
          %v31 = vld [vmem:[%s19 + $0x28] sm:%s12]
          %32 = vst [vmem:[%s20 + $0x28] sm:%s12] %v31
          %v33 = vld [vmem:[%s19 + $0x30] sm:%s12]
          %34 = vst [vmem:[%s20 + $0x30] sm:%s12] %v33
          %v35 = vld [vmem:[%s19 + $0x38] sm:%s12]
          %36 = vst [vmem:[%s20 + $0x38] sm:%s12] %v35
          %v37 = vld [vmem:[%s19 + $0x40] sm:%s12]
          %38 = vst [vmem:[%s20 + $0x40] sm:%s12] %v37
          %v39 = vld [vmem:[%s19 + $0x48] sm:%s12]
          %40 = vst [vmem:[%s20 + $0x48] sm:%s12] %v39
          %v41 = vld [vmem:[%s19 + $0x50] sm:%s12]
          %42 = vst [vmem:[%s20 + $0x50] sm:%s12] %v41
          %v43 = vld [vmem:[%s19 + $0x58] sm:%s12]
          %44 = vst [vmem:[%s20 + $0x58] sm:%s12] %v43
          %v45 = vld [vmem:[%s19 + $0x60] sm:%s12]
          %46 = vst [vmem:[%s20 + $0x60] sm:%s12] %v45
          %v47 = vld [vmem:[%s19 + $0x68] sm:%s12]
          %48 = vst [vmem:[%s20 + $0x68] sm:%s12] %v47
          %v49 = vld [vmem:[%s19 + $0x70] sm:%s12]
          %50 = vst [vmem:[%s20 + $0x70] sm:%s12] %v49
          %v51 = vld [vmem:[%s19 + $0x78] sm:%s12]
          %52 = vst [vmem:[%s20 + $0x78] sm:%s12] %v51
          %v53 = vld [vmem:[%s19 + $0x80] sm:%s12]
          %54 = vst [vmem:[%s20 + $0x80] sm:%s12] %v53
          %v55 = vld [vmem:[%s19 + $0x88] sm:%s12]
          %56 = vst [vmem:[%s20 + $0x88] sm:%s12] %v55
          %v57 = vld [vmem:[%s19 + $0x90] sm:%s12]
          %58 = vst [vmem:[%s20 + $0x90] sm:%s12] %v57
          %v59 = vld [vmem:[%s19 + $0x98] sm:%s12]
          %60 = vst [vmem:[%s20 + $0x98] sm:%s12] %v59
          %v61 = vld [vmem:[%s19 + $0xa0] sm:%s12]
          %62 = vst [vmem:[%s20 + $0xa0] sm:%s12] %v61
          %v63 = vld [vmem:[%s19 + $0xa8] sm:%s12]
          %64 = vst [vmem:[%s20 + $0xa8] sm:%s12] %v63
          %v65 = vld [vmem:[%s19 + $0xb0] sm:%s12]
          %66 = vst [vmem:[%s20 + $0xb0] sm:%s12] %v65
          %v67 = vld [vmem:[%s19 + $0xb8] sm:%s12]
          %68 = vst [vmem:[%s20 + $0xb8] sm:%s12] %v67
          %v69 = vld [vmem:[%s19 + $0xc0] sm:%s12]
          %70 = vst [vmem:[%s20 + $0xc0] sm:%s12] %v69
          %v71 = vld [vmem:[%s19 + $0xc8] sm:%s12]
          %72 = vst [vmem:[%s20 + $0xc8] sm:%s12] %v71
          %v73 = vld [vmem:[%s19 + $0xd0] sm:%s12]
          %74 = vst [vmem:[%s20 + $0xd0] sm:%s12] %v73
          %v75 = vld [vmem:[%s19 + $0xd8] sm:%s12]
          %76 = vst [vmem:[%s20 + $0xd8] sm:%s12] %v75
          %v77 = vld [vmem:[%s19 + $0xe0] sm:%s12]
          %78 = vst [vmem:[%s20 + $0xe0] sm:%s12] %v77
          %v79 = vld [vmem:[%s19 + $0xe8] sm:%s12]
          %80 = vst [vmem:[%s20 + $0xe8] sm:%s12] %v79
          %v81 = vld [vmem:[%s19 + $0xf0] sm:%s12]
          %82 = vst [vmem:[%s20 + $0xf0] sm:%s12] %v81
          %v83 = vld [vmem:[%s19 + $0xf8] sm:%s12]
          %84 = vst [vmem:[%s20 + $0xf8] sm:%s12] %v83
          %v85 = vld [vmem:[%s19 + $0x100] sm:%s12]
          %86 = vst [vmem:[%s20 + $0x100] sm:%s12] %v85
          %v87 = vld [vmem:[%s19 + $0x108] sm:%s12]
          %88 = vst [vmem:[%s20 + $0x108] sm:%s12] %v87
          %v89 = vld [vmem:[%s19 + $0x110] sm:%s12]
          %90 = vst [vmem:[%s20 + $0x110] sm:%s12] %v89
          %v91 = vld [vmem:[%s19 + $0x118] sm:%s12]
          %92 = vst [vmem:[%s20 + $0x118] sm:%s12] %v91
          %v93 = vld [vmem:[%s19 + $0x120] sm:%s12]
          %94 = vst [vmem:[%s20 + $0x120] sm:%s12] %v93
          %v95 = vld [vmem:[%s19 + $0x128] sm:%s12]
          %96 = vst [vmem:[%s20 + $0x128] sm:%s12] %v95
          %v97 = vld [vmem:[%s19 + $0x130] sm:%s12]
          %98 = vst [vmem:[%s20 + $0x130] sm:%s12] %v97
          %v99 = vld [vmem:[%s19 + $0x138] sm:%s12]
          %100 = vst [vmem:[%s20 + $0x138] sm:%s12] %v99
          %v101 = vld [vmem:[%s19 + $0x140] sm:%s12]
          %102 = vst [vmem:[%s20 + $0x140] sm:%s12] %v101
          %v103 = vld [vmem:[%s19 + $0x148] sm:%s12]
          %104 = vst [vmem:[%s20 + $0x148] sm:%s12] %v103
          %v105 = vld [vmem:[%s19 + $0x150] sm:%s12]
          %106 = vst [vmem:[%s20 + $0x150] sm:%s12] %v105
          %v107 = vld [vmem:[%s19 + $0x158] sm:%s12]
          %108 = vst [vmem:[%s20 + $0x158] sm:%s12] %v107
          %v109 = vld [vmem:[%s19 + $0x160] sm:%s12]
          %110 = vst [vmem:[%s20 + $0x160] sm:%s12] %v109
          %v111 = vld [vmem:[%s19 + $0x168] sm:%s12]
          %112 = vst [vmem:[%s20 + $0x168] sm:%s12] %v111
          %v113 = vld [vmem:[%s19 + $0x170] sm:%s12]
          %114 = vst [vmem:[%s20 + $0x170] sm:%s12] %v113
          %v115 = vld [vmem:[%s19 + $0x178] sm:%s12]
          %116 = vst [vmem:[%s20 + $0x178] sm:%s12] %v115
          %v117 = vld [vmem:[%s19 + $0x180] sm:%s12]
          %118 = vst [vmem:[%s20 + $0x180] sm:%s12] %v117
          %v119 = vld [vmem:[%s19 + $0x188] sm:%s12]
          %120 = vst [vmem:[%s20 + $0x188] sm:%s12] %v119
          %v121 = vld [vmem:[%s19 + $0x190] sm:%s12]
          %122 = vst [vmem:[%s20 + $0x190] sm:%s12] %v121
          %v123 = vld [vmem:[%s19 + $0x198] sm:%s12]
          %124 = vst [vmem:[%s20 + $0x198] sm:%s12] %v123
          %v125 = vld [vmem:[%s19 + $0x1a0] sm:%s12]
          %126 = vst [vmem:[%s20 + $0x1a0] sm:%s12] %v125
          %v127 = vld [vmem:[%s19 + $0x1a8] sm:%s12]
          %128 = vst [vmem:[%s20 + $0x1a8] sm:%s12] %v127
          %v129 = vld [vmem:[%s19 + $0x1b0] sm:%s12]
          %130 = vst [vmem:[%s20 + $0x1b0] sm:%s12] %v129
          %v131 = vld [vmem:[%s19 + $0x1b8] sm:%s12]
          %132 = vst [vmem:[%s20 + $0x1b8] sm:%s12] %v131
          %v133 = vld [vmem:[%s19 + $0x1c0] sm:%s12]
          %134 = vst [vmem:[%s20 + $0x1c0] sm:%s12] %v133
          %v135 = vld [vmem:[%s19 + $0x1c8] sm:%s12]
          %136 = vst [vmem:[%s20 + $0x1c8] sm:%s12] %v135
          %v137 = vld [vmem:[%s19 + $0x1d0] sm:%s12]
          %138 = vst [vmem:[%s20 + $0x1d0] sm:%s12] %v137
          %v139 = vld [vmem:[%s19 + $0x1d8] sm:%s12]
          %140 = vst [vmem:[%s20 + $0x1d8] sm:%s12] %v139
          %v141 = vld [vmem:[%s19 + $0x1e0] sm:%s12]
          %142 = vst [vmem:[%s20 + $0x1e0] sm:%s12] %v141
          %v143 = vld [vmem:[%s19 + $0x1e8] sm:%s12]
          %144 = vst [vmem:[%s20 + $0x1e8] sm:%s12] %v143
          %v145 = vld [vmem:[%s19 + $0x1f0] sm:%s12]
          %146 = vst [vmem:[%s20 + $0x1f0] sm:%s12] %v145
          %v147 = vld [vmem:[%s19 + $0x1f8] sm:%s12]
          %148 = vst [vmem:[%s20 + $0x1f8] sm:%s12] %v147
        $region18: #{reverse.4} parent=12 // loop_footer
          %s18 = sadd.s32 1, %s14
        $region19: #{reverse.4} parent=12 // loop_footer_branch
          %13 = sbr.rel target = $region15
        $region20: #{reverse.4} parent=12 // loop_exit
          _
      $region13: #{reverse.4} parent=4 // pred_fallthru
        _
    $region5: #{reverse.4} parent=1 // pred_fallthru
      _
    %289 = vnop
    %v290 = vld [vmem:[#allocation0] sm:$0xff]
    %291 = vperm.xlu0 %4, %v290
    %v292 = vpop.permute.xlu0 %291
    %293 = vst [vmem:[#allocation1] sm:$0xff] %v292
    %s294 = scalar_lea.vmem [#allocation1], 8
    %s295 = scalar_lea.vmem [#allocation0], 8
    %v296 = vld [vmem:[%s295] sm:$0xff]
    %297 = vperm.xlu0 %4, %v296
    %v298 = vpop.permute.xlu0 %297
    %299 = vst [vmem:[%s294] sm:$0xff] %v298
    %s300 = scalar_lea.vmem [#allocation1], 16
    %s301 = scalar_lea.vmem [#allocation0], 16
    %v302 = vld [vmem:[%s301] sm:$0xff]
    %303 = vperm.xlu0 %4, %v302
    %v304 = vpop.permute.xlu0 %303
    %305 = vst [vmem:[%s300] sm:$0xff] %v304
    %s306 = scalar_lea.vmem %s300, 8 [#allocation1]
    %s307 = scalar_lea.vmem %s301, 8 [#allocation0]
    %v308 = vld [vmem:[%s307] sm:$0xff]
    %309 = vperm.xlu0 %4, %v308
    %v310 = vpop.permute.xlu0 %309
    %311 = vst [vmem:[%s306] sm:$0xff] %v310
    %s312 = scalar_lea.vmem [#allocation1], 32
    %s313 = scalar_lea.vmem [#allocation0], 32
    %v314 = vld [vmem:[%s313] sm:$0xff]
    %315 = vperm.xlu0 %4, %v314
    %v316 = vpop.permute.xlu0 %315
    %317 = vst [vmem:[%s312] sm:$0xff] %v316
    %s318 = scalar_lea.vmem %s312, 8 [#allocation1]
    %s319 = scalar_lea.vmem %s313, 8 [#allocation0]
    %v320 = vld [vmem:[%s319] sm:$0xff]
    %321 = vperm.xlu0 %4, %v320
    %v322 = vpop.permute.xlu0 %321
    %323 = vst [vmem:[%s318] sm:$0xff] %v322
    %s324 = scalar_lea.vmem [#allocation1], 48
    %s325 = scalar_lea.vmem [#allocation0], 48
    %v326 = vld [vmem:[%s325] sm:$0xff]
    %327 = vperm.xlu0 %4, %v326
    %v328 = vpop.permute.xlu0 %327
    %329 = vst [vmem:[%s324] sm:$0xff] %v328
    %s330 = scalar_lea.vmem %s324, 8 [#allocation1]
    %s331 = scalar_lea.vmem %s325, 8 [#allocation0]
    %v332 = vld [vmem:[%s331] sm:$0xff]
    %333 = vperm.xlu0 %4, %v332
    %v334 = vpop.permute.xlu0 %333
    %335 = vst [vmem:[%s330] sm:$0xff] %v334
    %s336 = scalar_lea.vmem [#allocation1], 64
    %s337 = scalar_lea.vmem [#allocation0], 64
    %v338 = vld [vmem:[%s337] sm:$0xff]
    %339 = vperm.xlu0 %4, %v338
    %v340 = vpop.permute.xlu0 %339
    %341 = vst [vmem:[%s336] sm:$0xff] %v340
    %s342 = scalar_lea.vmem %s336, 8 [#allocation1]
    %s343 = scalar_lea.vmem %s337, 8 [#allocation0]
    %v344 = vld [vmem:[%s343] sm:$0xff]
    %345 = vperm.xlu0 %4, %v344
    %v346 = vpop.permute.xlu0 %345
    %347 = vst [vmem:[%s342] sm:$0xff] %v346
    %s348 = scalar_lea.vmem [#allocation1], 80
    %s349 = scalar_lea.vmem [#allocation0], 80
    %v350 = vld [vmem:[%s349] sm:$0xff]
    %351 = vperm.xlu0 %4, %v350
    %v352 = vpop.permute.xlu0 %351
    %353 = vst [vmem:[%s348] sm:$0xff] %v352
    %s354 = scalar_lea.vmem %s348, 8 [#allocation1]
    %s355 = scalar_lea.vmem %s349, 8 [#allocation0]
    %v356 = vld [vmem:[%s355] sm:$0xff]
    %357 = vperm.xlu0 %4, %v356
    %v358 = vpop.permute.xlu0 %357
    %359 = vst [vmem:[%s354] sm:$0xff] %v358
    %s360 = scalar_lea.vmem [#allocation1], 96
    %s361 = scalar_lea.vmem [#allocation0], 96
    %v362 = vld [vmem:[%s361] sm:$0xff]
    %363 = vperm.xlu0 %4, %v362
    %v364 = vpop.permute.xlu0 %363
    %365 = vst [vmem:[%s360] sm:$0xff] %v364
    %s366 = scalar_lea.vmem %s360, 8 [#allocation1]
    %s367 = scalar_lea.vmem %s361, 8 [#allocation0]
    %v368 = vld [vmem:[%s367] sm:$0xff]
    %369 = vperm.xlu0 %4, %v368
    %v370 = vpop.permute.xlu0 %369
    %371 = vst [vmem:[%s366] sm:$0xff] %v370
    %s372 = scalar_lea.vmem [#allocation1], 112
    %s373 = scalar_lea.vmem [#allocation0], 112
    %v374 = vld [vmem:[%s373] sm:$0xff]
    %375 = vperm.xlu0 %4, %v374
    %v376 = vpop.permute.xlu0 %375
    %377 = vst [vmem:[%s372] sm:$0xff] %v376
    %s378 = scalar_lea.vmem %s372, 8 [#allocation1]
    %s379 = scalar_lea.vmem %s373, 8 [#allocation0]
    %v380 = vld [vmem:[%s379] sm:$0xff]
    %381 = vperm.xlu0 %4, %v380
    %v382 = vpop.permute.xlu0 %381
    %383 = vst [vmem:[%s378] sm:$0xff] %v382
    %s384 = scalar_lea.vmem [#allocation1], 128
    %s385 = scalar_lea.vmem [#allocation0], 128
    %v386 = vld [vmem:[%s385] sm:$0xff]
    %387 = vperm.xlu0 %4, %v386
    %v388 = vpop.permute.xlu0 %387
    %389 = vst [vmem:[%s384] sm:$0xff] %v388
    %s390 = scalar_lea.vmem %s384, 8 [#allocation1]
    %s391 = scalar_lea.vmem %s385, 8 [#allocation0]
    %v392 = vld [vmem:[%s391] sm:$0xff]
    %393 = vperm.xlu0 %4, %v392
    %v394 = vpop.permute.xlu0 %393
    %395 = vst [vmem:[%s390] sm:$0xff] %v394
    %s396 = scalar_lea.vmem [#allocation1], 144
    %s397 = scalar_lea.vmem [#allocation0], 144
    %v398 = vld [vmem:[%s397] sm:$0xff]
    %399 = vperm.xlu0 %4, %v398
    %v400 = vpop.permute.xlu0 %399
    %401 = vst [vmem:[%s396] sm:$0xff] %v400
    %s402 = scalar_lea.vmem %s396, 8 [#allocation1]
    %s403 = scalar_lea.vmem %s397, 8 [#allocation0]
    %v404 = vld [vmem:[%s403] sm:$0xff]
    %405 = vperm.xlu0 %4, %v404
    %v406 = vpop.permute.xlu0 %405
    %407 = vst [vmem:[%s402] sm:$0xff] %v406
    %s408 = scalar_lea.vmem [#allocation1], 160
    %s409 = scalar_lea.vmem [#allocation0], 160
    %v410 = vld [vmem:[%s409] sm:$0xff]
    %411 = vperm.xlu0 %4, %v410
    %v412 = vpop.permute.xlu0 %411
    %413 = vst [vmem:[%s408] sm:$0xff] %v412
    %s414 = scalar_lea.vmem %s408, 8 [#allocation1]
    %s415 = scalar_lea.vmem %s409, 8 [#allocation0]
    %v416 = vld [vmem:[%s415] sm:$0xff]
    %417 = vperm.xlu0 %4, %v416
    %v418 = vpop.permute.xlu0 %417
    %419 = vst [vmem:[%s414] sm:$0xff] %v418
    %s420 = scalar_lea.vmem [#allocation1], 176
    %s421 = scalar_lea.vmem [#allocation0], 176
    %v422 = vld [vmem:[%s421] sm:$0xff]
    %423 = vperm.xlu0 %4, %v422
    %v424 = vpop.permute.xlu0 %423
    %425 = vst [vmem:[%s420] sm:$0xff] %v424
    %s426 = scalar_lea.vmem %s420, 8 [#allocation1]
    %s427 = scalar_lea.vmem %s421, 8 [#allocation0]
    %v428 = vld [vmem:[%s427] sm:$0xff]
    %429 = vperm.xlu0 %4, %v428
    %v430 = vpop.permute.xlu0 %429
    %431 = vst [vmem:[%s426] sm:$0xff] %v430
    %s432 = scalar_lea.vmem [#allocation1], 192
    %s433 = scalar_lea.vmem [#allocation0], 192
    %v434 = vld [vmem:[%s433] sm:$0xff]
    %435 = vperm.xlu0 %4, %v434
    %v436 = vpop.permute.xlu0 %435
    %437 = vst [vmem:[%s432] sm:$0xff] %v436
    %s438 = scalar_lea.vmem %s432, 8 [#allocation1]
    %s439 = scalar_lea.vmem %s433, 8 [#allocation0]
    %v440 = vld [vmem:[%s439] sm:$0xff]
    %441 = vperm.xlu0 %4, %v440
    %v442 = vpop.permute.xlu0 %441
    %443 = vst [vmem:[%s438] sm:$0xff] %v442
    %s444 = scalar_lea.vmem [#allocation1], 208
    %s445 = scalar_lea.vmem [#allocation0], 208
    %v446 = vld [vmem:[%s445] sm:$0xff]
    %447 = vperm.xlu0 %4, %v446
    %v448 = vpop.permute.xlu0 %447
    %449 = vst [vmem:[%s444] sm:$0xff] %v448
    %s450 = scalar_lea.vmem %s444, 8 [#allocation1]
    %s451 = scalar_lea.vmem %s445, 8 [#allocation0]
    %v452 = vld [vmem:[%s451] sm:$0xff]
    %453 = vperm.xlu0 %4, %v452
    %v454 = vpop.permute.xlu0 %453
    %455 = vst [vmem:[%s450] sm:$0xff] %v454
    %s456 = scalar_lea.vmem [#allocation1], 224
    %s457 = scalar_lea.vmem [#allocation0], 224
    %v458 = vld [vmem:[%s457] sm:$0xff]
    %459 = vperm.xlu0 %4, %v458
    %v460 = vpop.permute.xlu0 %459
    %461 = vst [vmem:[%s456] sm:$0xff] %v460
    %s462 = scalar_lea.vmem %s456, 8 [#allocation1]
    %s463 = scalar_lea.vmem %s457, 8 [#allocation0]
    %v464 = vld [vmem:[%s463] sm:$0xff]
    %465 = vperm.xlu0 %4, %v464
    %v466 = vpop.permute.xlu0 %465
    %467 = vst [vmem:[%s462] sm:$0xff] %v466
    %s468 = scalar_lea.vmem [#allocation1], 240
    %s469 = scalar_lea.vmem [#allocation0], 240
    %v470 = vld [vmem:[%s469] sm:$0xff]
    %471 = vperm.xlu0 %4, %v470
    %v472 = vpop.permute.xlu0 %471
    %473 = vst [vmem:[%s468] sm:$0xff] %v472
    %s474 = scalar_lea.vmem %s468, 8 [#allocation1]
    %s475 = scalar_lea.vmem %s469, 8 [#allocation0]
    %v476 = vld [vmem:[%s475] sm:$0xff]
    %477 = vperm.xlu0 %4, %v476
    %v478 = vpop.permute.xlu0 %477
    %479 = vst [vmem:[%s474] sm:$0xff] %v478
    %s480 = scalar_lea.vmem [#allocation1], 256
    %s481 = scalar_lea.vmem [#allocation0], 256
    %v482 = vld [vmem:[%s481] sm:$0xff]
    %483 = vperm.xlu0 %4, %v482
    %v484 = vpop.permute.xlu0 %483
    %485 = vst [vmem:[%s480] sm:$0xff] %v484
    %s486 = scalar_lea.vmem %s480, 8 [#allocation1]
    %s487 = scalar_lea.vmem %s481, 8 [#allocation0]
    %v488 = vld [vmem:[%s487] sm:$0xff]
    %489 = vperm.xlu0 %4, %v488
    %v490 = vpop.permute.xlu0 %489
    %491 = vst [vmem:[%s486] sm:$0xff] %v490
    %s492 = scalar_lea.vmem [#allocation1], 272
    %s493 = scalar_lea.vmem [#allocation0], 272
    %v494 = vld [vmem:[%s493] sm:$0xff]
    %495 = vperm.xlu0 %4, %v494
    %v496 = vpop.permute.xlu0 %495
    %497 = vst [vmem:[%s492] sm:$0xff] %v496
    %s498 = scalar_lea.vmem %s492, 8 [#allocation1]
    %s499 = scalar_lea.vmem %s493, 8 [#allocation0]
    %v500 = vld [vmem:[%s499] sm:$0xff]
    %501 = vperm.xlu0 %4, %v500
    %v502 = vpop.permute.xlu0 %501
    %503 = vst [vmem:[%s498] sm:$0xff] %v502
    %s504 = scalar_lea.vmem [#allocation1], 288
    %s505 = scalar_lea.vmem [#allocation0], 288
    %v506 = vld [vmem:[%s505] sm:$0xff]
    %507 = vperm.xlu0 %4, %v506
    %v508 = vpop.permute.xlu0 %507
    %509 = vst [vmem:[%s504] sm:$0xff] %v508
    %s510 = scalar_lea.vmem %s504, 8 [#allocation1]
    %s511 = scalar_lea.vmem %s505, 8 [#allocation0]
    %v512 = vld [vmem:[%s511] sm:$0xff]
    %513 = vperm.xlu0 %4, %v512
    %v514 = vpop.permute.xlu0 %513
    %515 = vst [vmem:[%s510] sm:$0xff] %v514
    %s516 = scalar_lea.vmem [#allocation1], 304
    %s517 = scalar_lea.vmem [#allocation0], 304
    %v518 = vld [vmem:[%s517] sm:$0xff]
    %519 = vperm.xlu0 %4, %v518
    %v520 = vpop.permute.xlu0 %519
    %521 = vst [vmem:[%s516] sm:$0xff] %v520
    %s522 = scalar_lea.vmem %s516, 8 [#allocation1]
    %s523 = scalar_lea.vmem %s517, 8 [#allocation0]
    %v524 = vld [vmem:[%s523] sm:$0xff]
    %525 = vperm.xlu0 %4, %v524
    %v526 = vpop.permute.xlu0 %525
    %527 = vst [vmem:[%s522] sm:$0xff] %v526
    %s528 = scalar_lea.vmem [#allocation1], 320
    %s529 = scalar_lea.vmem [#allocation0], 320
    %v530 = vld [vmem:[%s529] sm:$0xff]
    %531 = vperm.xlu0 %4, %v530
    %v532 = vpop.permute.xlu0 %531
    %533 = vst [vmem:[%s528] sm:$0xff] %v532
    %s534 = scalar_lea.vmem %s528, 8 [#allocation1]
    %s535 = scalar_lea.vmem %s529, 8 [#allocation0]
    %v536 = vld [vmem:[%s535] sm:$0xff]
    %537 = vperm.xlu0 %4, %v536
    %v538 = vpop.permute.xlu0 %537
    %539 = vst [vmem:[%s534] sm:$0xff] %v538
    %s540 = scalar_lea.vmem [#allocation1], 336
    %s541 = scalar_lea.vmem [#allocation0], 336
    %v542 = vld [vmem:[%s541] sm:$0xff]
    %543 = vperm.xlu0 %4, %v542
    %v544 = vpop.permute.xlu0 %543
    %545 = vst [vmem:[%s540] sm:$0xff] %v544
    %s546 = scalar_lea.vmem %s540, 8 [#allocation1]
    %s547 = scalar_lea.vmem %s541, 8 [#allocation0]
    %v548 = vld [vmem:[%s547] sm:$0xff]
    %549 = vperm.xlu0 %4, %v548
    %v550 = vpop.permute.xlu0 %549
    %551 = vst [vmem:[%s546] sm:$0xff] %v550
    %s552 = scalar_lea.vmem [#allocation1], 352
    %s553 = scalar_lea.vmem [#allocation0], 352
    %v554 = vld [vmem:[%s553] sm:$0xff]
    %555 = vperm.xlu0 %4, %v554
    %v556 = vpop.permute.xlu0 %555
    %557 = vst [vmem:[%s552] sm:$0xff] %v556
    %s558 = scalar_lea.vmem %s552, 8 [#allocation1]
    %s559 = scalar_lea.vmem %s553, 8 [#allocation0]
    %v560 = vld [vmem:[%s559] sm:$0xff]
    %561 = vperm.xlu0 %4, %v560
    %v562 = vpop.permute.xlu0 %561
    %563 = vst [vmem:[%s558] sm:$0xff] %v562
    %s564 = scalar_lea.vmem [#allocation1], 368
    %s565 = scalar_lea.vmem [#allocation0], 368
    %v566 = vld [vmem:[%s565] sm:$0xff]
    %567 = vperm.xlu0 %4, %v566
    %v568 = vpop.permute.xlu0 %567
    %569 = vst [vmem:[%s564] sm:$0xff] %v568
    %s570 = scalar_lea.vmem %s564, 8 [#allocation1]
    %s571 = scalar_lea.vmem %s565, 8 [#allocation0]
    %v572 = vld [vmem:[%s571] sm:$0xff]
    %573 = vperm.xlu0 %4, %v572
    %v574 = vpop.permute.xlu0 %573
    %575 = vst [vmem:[%s570] sm:$0xff] %v574
    %s576 = scalar_lea.vmem [#allocation1], 384
    %s577 = scalar_lea.vmem [#allocation0], 384
    %v578 = vld [vmem:[%s577] sm:$0xff]
    %579 = vperm.xlu0 %4, %v578
    %v580 = vpop.permute.xlu0 %579
    %581 = vst [vmem:[%s576] sm:$0xff] %v580
    %s582 = scalar_lea.vmem %s576, 8 [#allocation1]
    %s583 = scalar_lea.vmem %s577, 8 [#allocation0]
    %v584 = vld [vmem:[%s583] sm:$0xff]
    %585 = vperm.xlu0 %4, %v584
    %v586 = vpop.permute.xlu0 %585
    %587 = vst [vmem:[%s582] sm:$0xff] %v586
    %s588 = scalar_lea.vmem [#allocation1], 400
    %s589 = scalar_lea.vmem [#allocation0], 400
    %v590 = vld [vmem:[%s589] sm:$0xff]
    %591 = vperm.xlu0 %4, %v590
    %v592 = vpop.permute.xlu0 %591
    %593 = vst [vmem:[%s588] sm:$0xff] %v592
    %s594 = scalar_lea.vmem %s588, 8 [#allocation1]
    %s595 = scalar_lea.vmem %s589, 8 [#allocation0]
    %v596 = vld [vmem:[%s595] sm:$0xff]
    %597 = vperm.xlu0 %4, %v596
    %v598 = vpop.permute.xlu0 %597
    %599 = vst [vmem:[%s594] sm:$0xff] %v598
    %s600 = scalar_lea.vmem [#allocation1], 416
    %s601 = scalar_lea.vmem [#allocation0], 416
    %v602 = vld [vmem:[%s601] sm:$0xff]
    %603 = vperm.xlu0 %4, %v602
    %v604 = vpop.permute.xlu0 %603
    %605 = vst [vmem:[%s600] sm:$0xff] %v604
    %s606 = scalar_lea.vmem %s600, 8 [#allocation1]
    %s607 = scalar_lea.vmem %s601, 8 [#allocation0]
    %v608 = vld [vmem:[%s607] sm:$0xff]
    %609 = vperm.xlu0 %4, %v608
    %v610 = vpop.permute.xlu0 %609
    %611 = vst [vmem:[%s606] sm:$0xff] %v610
    %s612 = scalar_lea.vmem [#allocation1], 432
    %s613 = scalar_lea.vmem [#allocation0], 432
    %v614 = vld [vmem:[%s613] sm:$0xff]
    %615 = vperm.xlu0 %4, %v614
    %v616 = vpop.permute.xlu0 %615
    %617 = vst [vmem:[%s612] sm:$0xff] %v616
    %s618 = scalar_lea.vmem %s612, 8 [#allocation1]
    %s619 = scalar_lea.vmem %s613, 8 [#allocation0]
    %v620 = vld [vmem:[%s619] sm:$0xff]
    %621 = vperm.xlu0 %4, %v620
    %v622 = vpop.permute.xlu0 %621
    %623 = vst [vmem:[%s618] sm:$0xff] %v622
    %s624 = scalar_lea.vmem [#allocation1], 448
    %s625 = scalar_lea.vmem [#allocation0], 448
    %v626 = vld [vmem:[%s625] sm:$0xff]
    %627 = vperm.xlu0 %4, %v626
    %v628 = vpop.permute.xlu0 %627
    %629 = vst [vmem:[%s624] sm:$0xff] %v628
    %s630 = scalar_lea.vmem %s624, 8 [#allocation1]
    %s631 = scalar_lea.vmem %s625, 8 [#allocation0]
    %v632 = vld [vmem:[%s631] sm:$0xff]
    %633 = vperm.xlu0 %4, %v632
    %v634 = vpop.permute.xlu0 %633
    %635 = vst [vmem:[%s630] sm:$0xff] %v634
    %s636 = scalar_lea.vmem [#allocation1], 464
    %s637 = scalar_lea.vmem [#allocation0], 464
    %v638 = vld [vmem:[%s637] sm:$0xff]
    %639 = vperm.xlu0 %4, %v638
    %v640 = vpop.permute.xlu0 %639
    %641 = vst [vmem:[%s636] sm:$0xff] %v640
    %s642 = scalar_lea.vmem %s636, 8 [#allocation1]
    %s643 = scalar_lea.vmem %s637, 8 [#allocation0]
    %v644 = vld [vmem:[%s643] sm:$0xff]
    %645 = vperm.xlu0 %4, %v644
    %v646 = vpop.permute.xlu0 %645
    %647 = vst [vmem:[%s642] sm:$0xff] %v646
    %s648 = scalar_lea.vmem [#allocation1], 480
    %s649 = scalar_lea.vmem [#allocation0], 480
    %v650 = vld [vmem:[%s649] sm:$0xff]
    %651 = vperm.xlu0 %4, %v650
    %v652 = vpop.permute.xlu0 %651
    %653 = vst [vmem:[%s648] sm:$0xff] %v652
    %s654 = scalar_lea.vmem %s648, 8 [#allocation1]
    %s655 = scalar_lea.vmem %s649, 8 [#allocation0]
    %v656 = vld [vmem:[%s655] sm:$0xff]
    %657 = vperm.xlu0 %4, %v656
    %v658 = vpop.permute.xlu0 %657
    %659 = vst [vmem:[%s654] sm:$0xff] %v658
    %s660 = scalar_lea.vmem [#allocation1], 496
    %s661 = scalar_lea.vmem [#allocation0], 496
    %v662 = vld [vmem:[%s661] sm:$0xff]
    %663 = vperm.xlu0 %4, %v662
    %v664 = vpop.permute.xlu0 %663
    %665 = vst [vmem:[%s660] sm:$0xff] %v664
    %s666 = scalar_lea.vmem %s660, 8 [#allocation1]
    %s667 = scalar_lea.vmem %s661, 8 [#allocation0]
    %v668 = vld [vmem:[%s667] sm:$0xff]
    %669 = vperm.xlu0 %4, %v668
    %v670 = vpop.permute.xlu0 %669
    %671 = vst [vmem:[%s666] sm:$0xff] %v670
    // Predicated region
    $region36: #{reverse.4} parent=1 // pred_check
      _
    $region37: #{reverse.4} parent=1 // pred_check_branch
      %673 = sbr.rel (0) target = $region39
    $region38: #{reverse.4} parent=1 // pred_region
      // Predicated region
      $region40: #{reverse.4} parent=38 // pred_check
        _
      $region41: #{reverse.4} parent=38 // pred_check_branch
        %675 = sbr.rel (0) target = $region43
      $region42: #{reverse.4} parent=38 // pred_region
        // Predicated region
        $region55: #{reverse.4} parent=42 // pred_check
          _
        $region56: #{reverse.4} parent=42 // pred_check_branch
          %817 = sbr.rel (0) target = $region58
        $region57: #{reverse.4} parent=42 // pred_region
          loop: start=0, step=1, limit=1
          $region59: #{reverse.4} parent=57 // loop_pre_header
            _
          $region60: #{reverse.4} parent=57 // loop_header
            %s819 = sphi 0, %s823
            %p820 = scmp.ge.s32.totalorder %s819, 1
            %s824 = sphi [#allocation1], [#allocation1]
            %s825 = sphi %s1, %s1
          $region61: #{reverse.4} parent=57 // loop_header_branch
            %822 = sbr.rel (%p820) target = $region65
          $region62: #{reverse.4} parent=57 // loop_body
            %v826 = vld [vmem:[%s824] sm:$0xff]
            %827 = vst [vmem:[%s825] sm:$0xff] %v826
            %v828 = vld [vmem:[%s824 + $0x8] sm:$0xff]
            %829 = vst [vmem:[%s825 + $0x8] sm:$0xff] %v828
            %v830 = vld [vmem:[%s824 + $0x10] sm:$0xff]
            %831 = vst [vmem:[%s825 + $0x10] sm:$0xff] %v830
            %v832 = vld [vmem:[%s824 + $0x18] sm:$0xff]
            %833 = vst [vmem:[%s825 + $0x18] sm:$0xff] %v832
            %v834 = vld [vmem:[%s824 + $0x20] sm:$0xff]
            %835 = vst [vmem:[%s825 + $0x20] sm:$0xff] %v834
            %v836 = vld [vmem:[%s824 + $0x28] sm:$0xff]
            %837 = vst [vmem:[%s825 + $0x28] sm:$0xff] %v836
            %v838 = vld [vmem:[%s824 + $0x30] sm:$0xff]
            %839 = vst [vmem:[%s825 + $0x30] sm:$0xff] %v838
            %v840 = vld [vmem:[%s824 + $0x38] sm:$0xff]
            %841 = vst [vmem:[%s825 + $0x38] sm:$0xff] %v840
            %v842 = vld [vmem:[%s824 + $0x40] sm:$0xff]
            %843 = vst [vmem:[%s825 + $0x40] sm:$0xff] %v842
            %v844 = vld [vmem:[%s824 + $0x48] sm:$0xff]
            %845 = vst [vmem:[%s825 + $0x48] sm:$0xff] %v844
            %v846 = vld [vmem:[%s824 + $0x50] sm:$0xff]
            %847 = vst [vmem:[%s825 + $0x50] sm:$0xff] %v846
            %v848 = vld [vmem:[%s824 + $0x58] sm:$0xff]
            %849 = vst [vmem:[%s825 + $0x58] sm:$0xff] %v848
            %v850 = vld [vmem:[%s824 + $0x60] sm:$0xff]
            %851 = vst [vmem:[%s825 + $0x60] sm:$0xff] %v850
            %v852 = vld [vmem:[%s824 + $0x68] sm:$0xff]
            %853 = vst [vmem:[%s825 + $0x68] sm:$0xff] %v852
            %v854 = vld [vmem:[%s824 + $0x70] sm:$0xff]
            %855 = vst [vmem:[%s825 + $0x70] sm:$0xff] %v854
            %v856 = vld [vmem:[%s824 + $0x78] sm:$0xff]
            %857 = vst [vmem:[%s825 + $0x78] sm:$0xff] %v856
            %v858 = vld [vmem:[%s824 + $0x80] sm:$0xff]
            %859 = vst [vmem:[%s825 + $0x80] sm:$0xff] %v858
            %v860 = vld [vmem:[%s824 + $0x88] sm:$0xff]
            %861 = vst [vmem:[%s825 + $0x88] sm:$0xff] %v860
            %v862 = vld [vmem:[%s824 + $0x90] sm:$0xff]
            %863 = vst [vmem:[%s825 + $0x90] sm:$0xff] %v862
            %v864 = vld [vmem:[%s824 + $0x98] sm:$0xff]
            %865 = vst [vmem:[%s825 + $0x98] sm:$0xff] %v864
            %v866 = vld [vmem:[%s824 + $0xa0] sm:$0xff]
            %867 = vst [vmem:[%s825 + $0xa0] sm:$0xff] %v866
            %v868 = vld [vmem:[%s824 + $0xa8] sm:$0xff]
            %869 = vst [vmem:[%s825 + $0xa8] sm:$0xff] %v868
            %v870 = vld [vmem:[%s824 + $0xb0] sm:$0xff]
            %871 = vst [vmem:[%s825 + $0xb0] sm:$0xff] %v870
            %v872 = vld [vmem:[%s824 + $0xb8] sm:$0xff]
            %873 = vst [vmem:[%s825 + $0xb8] sm:$0xff] %v872
            %v874 = vld [vmem:[%s824 + $0xc0] sm:$0xff]
            %875 = vst [vmem:[%s825 + $0xc0] sm:$0xff] %v874
            %v876 = vld [vmem:[%s824 + $0xc8] sm:$0xff]
            %877 = vst [vmem:[%s825 + $0xc8] sm:$0xff] %v876
            %v878 = vld [vmem:[%s824 + $0xd0] sm:$0xff]
            %879 = vst [vmem:[%s825 + $0xd0] sm:$0xff] %v878
            %v880 = vld [vmem:[%s824 + $0xd8] sm:$0xff]
            %881 = vst [vmem:[%s825 + $0xd8] sm:$0xff] %v880
            %v882 = vld [vmem:[%s824 + $0xe0] sm:$0xff]
            %883 = vst [vmem:[%s825 + $0xe0] sm:$0xff] %v882
            %v884 = vld [vmem:[%s824 + $0xe8] sm:$0xff]
            %885 = vst [vmem:[%s825 + $0xe8] sm:$0xff] %v884
            %v886 = vld [vmem:[%s824 + $0xf0] sm:$0xff]
            %887 = vst [vmem:[%s825 + $0xf0] sm:$0xff] %v886
            %v888 = vld [vmem:[%s824 + $0xf8] sm:$0xff]
            %889 = vst [vmem:[%s825 + $0xf8] sm:$0xff] %v888
            %v890 = vld [vmem:[%s824 + $0x100] sm:$0xff]
            %891 = vst [vmem:[%s825 + $0x100] sm:$0xff] %v890
            %v892 = vld [vmem:[%s824 + $0x108] sm:$0xff]
            %893 = vst [vmem:[%s825 + $0x108] sm:$0xff] %v892
            %v894 = vld [vmem:[%s824 + $0x110] sm:$0xff]
            %895 = vst [vmem:[%s825 + $0x110] sm:$0xff] %v894
            %v896 = vld [vmem:[%s824 + $0x118] sm:$0xff]
            %897 = vst [vmem:[%s825 + $0x118] sm:$0xff] %v896
            %v898 = vld [vmem:[%s824 + $0x120] sm:$0xff]
            %899 = vst [vmem:[%s825 + $0x120] sm:$0xff] %v898
            %v900 = vld [vmem:[%s824 + $0x128] sm:$0xff]
            %901 = vst [vmem:[%s825 + $0x128] sm:$0xff] %v900
            %v902 = vld [vmem:[%s824 + $0x130] sm:$0xff]
            %903 = vst [vmem:[%s825 + $0x130] sm:$0xff] %v902
            %v904 = vld [vmem:[%s824 + $0x138] sm:$0xff]
            %905 = vst [vmem:[%s825 + $0x138] sm:$0xff] %v904
            %v906 = vld [vmem:[%s824 + $0x140] sm:$0xff]
            %907 = vst [vmem:[%s825 + $0x140] sm:$0xff] %v906
            %v908 = vld [vmem:[%s824 + $0x148] sm:$0xff]
            %909 = vst [vmem:[%s825 + $0x148] sm:$0xff] %v908
            %v910 = vld [vmem:[%s824 + $0x150] sm:$0xff]
            %911 = vst [vmem:[%s825 + $0x150] sm:$0xff] %v910
            %v912 = vld [vmem:[%s824 + $0x158] sm:$0xff]
            %913 = vst [vmem:[%s825 + $0x158] sm:$0xff] %v912
            %v914 = vld [vmem:[%s824 + $0x160] sm:$0xff]
            %915 = vst [vmem:[%s825 + $0x160] sm:$0xff] %v914
            %v916 = vld [vmem:[%s824 + $0x168] sm:$0xff]
            %917 = vst [vmem:[%s825 + $0x168] sm:$0xff] %v916
            %v918 = vld [vmem:[%s824 + $0x170] sm:$0xff]
            %919 = vst [vmem:[%s825 + $0x170] sm:$0xff] %v918
            %v920 = vld [vmem:[%s824 + $0x178] sm:$0xff]
            %921 = vst [vmem:[%s825 + $0x178] sm:$0xff] %v920
            %v922 = vld [vmem:[%s824 + $0x180] sm:$0xff]
            %923 = vst [vmem:[%s825 + $0x180] sm:$0xff] %v922
            %v924 = vld [vmem:[%s824 + $0x188] sm:$0xff]
            %925 = vst [vmem:[%s825 + $0x188] sm:$0xff] %v924
            %v926 = vld [vmem:[%s824 + $0x190] sm:$0xff]
            %927 = vst [vmem:[%s825 + $0x190] sm:$0xff] %v926
            %v928 = vld [vmem:[%s824 + $0x198] sm:$0xff]
            %929 = vst [vmem:[%s825 + $0x198] sm:$0xff] %v928
            %v930 = vld [vmem:[%s824 + $0x1a0] sm:$0xff]
            %931 = vst [vmem:[%s825 + $0x1a0] sm:$0xff] %v930
            %v932 = vld [vmem:[%s824 + $0x1a8] sm:$0xff]
            %933 = vst [vmem:[%s825 + $0x1a8] sm:$0xff] %v932
            %v934 = vld [vmem:[%s824 + $0x1b0] sm:$0xff]
            %935 = vst [vmem:[%s825 + $0x1b0] sm:$0xff] %v934
            %v936 = vld [vmem:[%s824 + $0x1b8] sm:$0xff]
            %937 = vst [vmem:[%s825 + $0x1b8] sm:$0xff] %v936
            %v938 = vld [vmem:[%s824 + $0x1c0] sm:$0xff]
            %939 = vst [vmem:[%s825 + $0x1c0] sm:$0xff] %v938
            %v940 = vld [vmem:[%s824 + $0x1c8] sm:$0xff]
            %941 = vst [vmem:[%s825 + $0x1c8] sm:$0xff] %v940
            %v942 = vld [vmem:[%s824 + $0x1d0] sm:$0xff]
            %943 = vst [vmem:[%s825 + $0x1d0] sm:$0xff] %v942
            %v944 = vld [vmem:[%s824 + $0x1d8] sm:$0xff]
            %945 = vst [vmem:[%s825 + $0x1d8] sm:$0xff] %v944
            %v946 = vld [vmem:[%s824 + $0x1e0] sm:$0xff]
            %947 = vst [vmem:[%s825 + $0x1e0] sm:$0xff] %v946
            %v948 = vld [vmem:[%s824 + $0x1e8] sm:$0xff]
            %949 = vst [vmem:[%s825 + $0x1e8] sm:$0xff] %v948
            %v950 = vld [vmem:[%s824 + $0x1f0] sm:$0xff]
            %951 = vst [vmem:[%s825 + $0x1f0] sm:$0xff] %v950
            %v952 = vld [vmem:[%s824 + $0x1f8] sm:$0xff]
            %953 = vst [vmem:[%s825 + $0x1f8] sm:$0xff] %v952
          $region63: #{reverse.4} parent=57 // loop_footer
            %s823 = sadd.s32 1, %s819
          $region64: #{reverse.4} parent=57 // loop_footer_branch
            %818 = sbr.rel target = $region60
          $region65: #{reverse.4} parent=57 // loop_exit
            _
        $region58: #{reverse.4} parent=42 // pred_fallthru
          _
        // Predicated region
        $region66: #{reverse.4} parent=42 // pred_check
          _
        $region67: #{reverse.4} parent=42 // pred_check_branch
          %955 = sbr.rel target = $region69
        $region68: #{reverse.4} parent=42 // pred_region
          _
        $region69: #{reverse.4} parent=42 // pred_fallthru
          _
      $region43: #{reverse.4} parent=38 // pred_fallthru
        _
      // Predicated region
      $region44: #{reverse.4} parent=38 // pred_check
        _
      $region45: #{reverse.4} parent=38 // pred_check_branch
        %677 = sbr.rel target = $region47
      $region46: #{reverse.4} parent=38 // pred_region
        %s679 = ssub.s32 256, 1
        loop: start=0, step=1, limit=1
        $region48: #{reverse.4} parent=46 // loop_pre_header
          _
        $region49: #{reverse.4} parent=46 // loop_header
          %s681 = sphi 0, %s685
          %p682 = scmp.ge.s32.totalorder %s681, 1
          %s686 = sphi [#allocation1], [#allocation1]
          %s687 = sphi %s1, %s1
        $region50: #{reverse.4} parent=46 // loop_header_branch
          %684 = sbr.rel (%p682) target = $region54
        $region51: #{reverse.4} parent=46 // loop_body
          %v688 = vld [vmem:[%s686] sm:%s679]
          %689 = vst [vmem:[%s687] sm:%s679] %v688
          %v690 = vld [vmem:[%s686 + $0x8] sm:%s679]
          %691 = vst [vmem:[%s687 + $0x8] sm:%s679] %v690
          %v692 = vld [vmem:[%s686 + $0x10] sm:%s679]
          %693 = vst [vmem:[%s687 + $0x10] sm:%s679] %v692
          %v694 = vld [vmem:[%s686 + $0x18] sm:%s679]
          %695 = vst [vmem:[%s687 + $0x18] sm:%s679] %v694
          %v696 = vld [vmem:[%s686 + $0x20] sm:%s679]
          %697 = vst [vmem:[%s687 + $0x20] sm:%s679] %v696
          %v698 = vld [vmem:[%s686 + $0x28] sm:%s679]
          %699 = vst [vmem:[%s687 + $0x28] sm:%s679] %v698
          %v700 = vld [vmem:[%s686 + $0x30] sm:%s679]
          %701 = vst [vmem:[%s687 + $0x30] sm:%s679] %v700
          %v702 = vld [vmem:[%s686 + $0x38] sm:%s679]
          %703 = vst [vmem:[%s687 + $0x38] sm:%s679] %v702
          %v704 = vld [vmem:[%s686 + $0x40] sm:%s679]
          %705 = vst [vmem:[%s687 + $0x40] sm:%s679] %v704
          %v706 = vld [vmem:[%s686 + $0x48] sm:%s679]
          %707 = vst [vmem:[%s687 + $0x48] sm:%s679] %v706
          %v708 = vld [vmem:[%s686 + $0x50] sm:%s679]
          %709 = vst [vmem:[%s687 + $0x50] sm:%s679] %v708
          %v710 = vld [vmem:[%s686 + $0x58] sm:%s679]
          %711 = vst [vmem:[%s687 + $0x58] sm:%s679] %v710
          %v712 = vld [vmem:[%s686 + $0x60] sm:%s679]
          %713 = vst [vmem:[%s687 + $0x60] sm:%s679] %v712
          %v714 = vld [vmem:[%s686 + $0x68] sm:%s679]
          %715 = vst [vmem:[%s687 + $0x68] sm:%s679] %v714
          %v716 = vld [vmem:[%s686 + $0x70] sm:%s679]
          %717 = vst [vmem:[%s687 + $0x70] sm:%s679] %v716
          %v718 = vld [vmem:[%s686 + $0x78] sm:%s679]
          %719 = vst [vmem:[%s687 + $0x78] sm:%s679] %v718
          %v720 = vld [vmem:[%s686 + $0x80] sm:%s679]
          %721 = vst [vmem:[%s687 + $0x80] sm:%s679] %v720
          %v722 = vld [vmem:[%s686 + $0x88] sm:%s679]
          %723 = vst [vmem:[%s687 + $0x88] sm:%s679] %v722
          %v724 = vld [vmem:[%s686 + $0x90] sm:%s679]
          %725 = vst [vmem:[%s687 + $0x90] sm:%s679] %v724
          %v726 = vld [vmem:[%s686 + $0x98] sm:%s679]
          %727 = vst [vmem:[%s687 + $0x98] sm:%s679] %v726
          %v728 = vld [vmem:[%s686 + $0xa0] sm:%s679]
          %729 = vst [vmem:[%s687 + $0xa0] sm:%s679] %v728
          %v730 = vld [vmem:[%s686 + $0xa8] sm:%s679]
          %731 = vst [vmem:[%s687 + $0xa8] sm:%s679] %v730
          %v732 = vld [vmem:[%s686 + $0xb0] sm:%s679]
          %733 = vst [vmem:[%s687 + $0xb0] sm:%s679] %v732
          %v734 = vld [vmem:[%s686 + $0xb8] sm:%s679]
          %735 = vst [vmem:[%s687 + $0xb8] sm:%s679] %v734
          %v736 = vld [vmem:[%s686 + $0xc0] sm:%s679]
          %737 = vst [vmem:[%s687 + $0xc0] sm:%s679] %v736
          %v738 = vld [vmem:[%s686 + $0xc8] sm:%s679]
          %739 = vst [vmem:[%s687 + $0xc8] sm:%s679] %v738
          %v740 = vld [vmem:[%s686 + $0xd0] sm:%s679]
          %741 = vst [vmem:[%s687 + $0xd0] sm:%s679] %v740
          %v742 = vld [vmem:[%s686 + $0xd8] sm:%s679]
          %743 = vst [vmem:[%s687 + $0xd8] sm:%s679] %v742
          %v744 = vld [vmem:[%s686 + $0xe0] sm:%s679]
          %745 = vst [vmem:[%s687 + $0xe0] sm:%s679] %v744
          %v746 = vld [vmem:[%s686 + $0xe8] sm:%s679]
          %747 = vst [vmem:[%s687 + $0xe8] sm:%s679] %v746
          %v748 = vld [vmem:[%s686 + $0xf0] sm:%s679]
          %749 = vst [vmem:[%s687 + $0xf0] sm:%s679] %v748
          %v750 = vld [vmem:[%s686 + $0xf8] sm:%s679]
          %751 = vst [vmem:[%s687 + $0xf8] sm:%s679] %v750
          %v752 = vld [vmem:[%s686 + $0x100] sm:%s679]
          %753 = vst [vmem:[%s687 + $0x100] sm:%s679] %v752
          %v754 = vld [vmem:[%s686 + $0x108] sm:%s679]
          %755 = vst [vmem:[%s687 + $0x108] sm:%s679] %v754
          %v756 = vld [vmem:[%s686 + $0x110] sm:%s679]
          %757 = vst [vmem:[%s687 + $0x110] sm:%s679] %v756
          %v758 = vld [vmem:[%s686 + $0x118] sm:%s679]
          %759 = vst [vmem:[%s687 + $0x118] sm:%s679] %v758
          %v760 = vld [vmem:[%s686 + $0x120] sm:%s679]
          %761 = vst [vmem:[%s687 + $0x120] sm:%s679] %v760
          %v762 = vld [vmem:[%s686 + $0x128] sm:%s679]
          %763 = vst [vmem:[%s687 + $0x128] sm:%s679] %v762
          %v764 = vld [vmem:[%s686 + $0x130] sm:%s679]
          %765 = vst [vmem:[%s687 + $0x130] sm:%s679] %v764
          %v766 = vld [vmem:[%s686 + $0x138] sm:%s679]
          %767 = vst [vmem:[%s687 + $0x138] sm:%s679] %v766
          %v768 = vld [vmem:[%s686 + $0x140] sm:%s679]
          %769 = vst [vmem:[%s687 + $0x140] sm:%s679] %v768
          %v770 = vld [vmem:[%s686 + $0x148] sm:%s679]
          %771 = vst [vmem:[%s687 + $0x148] sm:%s679] %v770
          %v772 = vld [vmem:[%s686 + $0x150] sm:%s679]
          %773 = vst [vmem:[%s687 + $0x150] sm:%s679] %v772
          %v774 = vld [vmem:[%s686 + $0x158] sm:%s679]
          %775 = vst [vmem:[%s687 + $0x158] sm:%s679] %v774
          %v776 = vld [vmem:[%s686 + $0x160] sm:%s679]
          %777 = vst [vmem:[%s687 + $0x160] sm:%s679] %v776
          %v778 = vld [vmem:[%s686 + $0x168] sm:%s679]
          %779 = vst [vmem:[%s687 + $0x168] sm:%s679] %v778
          %v780 = vld [vmem:[%s686 + $0x170] sm:%s679]
          %781 = vst [vmem:[%s687 + $0x170] sm:%s679] %v780
          %v782 = vld [vmem:[%s686 + $0x178] sm:%s679]
          %783 = vst [vmem:[%s687 + $0x178] sm:%s679] %v782
          %v784 = vld [vmem:[%s686 + $0x180] sm:%s679]
          %785 = vst [vmem:[%s687 + $0x180] sm:%s679] %v784
          %v786 = vld [vmem:[%s686 + $0x188] sm:%s679]
          %787 = vst [vmem:[%s687 + $0x188] sm:%s679] %v786
          %v788 = vld [vmem:[%s686 + $0x190] sm:%s679]
          %789 = vst [vmem:[%s687 + $0x190] sm:%s679] %v788
          %v790 = vld [vmem:[%s686 + $0x198] sm:%s679]
          %791 = vst [vmem:[%s687 + $0x198] sm:%s679] %v790
          %v792 = vld [vmem:[%s686 + $0x1a0] sm:%s679]
          %793 = vst [vmem:[%s687 + $0x1a0] sm:%s679] %v792
          %v794 = vld [vmem:[%s686 + $0x1a8] sm:%s679]
          %795 = vst [vmem:[%s687 + $0x1a8] sm:%s679] %v794
          %v796 = vld [vmem:[%s686 + $0x1b0] sm:%s679]
          %797 = vst [vmem:[%s687 + $0x1b0] sm:%s679] %v796
          %v798 = vld [vmem:[%s686 + $0x1b8] sm:%s679]
          %799 = vst [vmem:[%s687 + $0x1b8] sm:%s679] %v798
          %v800 = vld [vmem:[%s686 + $0x1c0] sm:%s679]
          %801 = vst [vmem:[%s687 + $0x1c0] sm:%s679] %v800
          %v802 = vld [vmem:[%s686 + $0x1c8] sm:%s679]
          %803 = vst [vmem:[%s687 + $0x1c8] sm:%s679] %v802
          %v804 = vld [vmem:[%s686 + $0x1d0] sm:%s679]
          %805 = vst [vmem:[%s687 + $0x1d0] sm:%s679] %v804
          %v806 = vld [vmem:[%s686 + $0x1d8] sm:%s679]
          %807 = vst [vmem:[%s687 + $0x1d8] sm:%s679] %v806
          %v808 = vld [vmem:[%s686 + $0x1e0] sm:%s679]
          %809 = vst [vmem:[%s687 + $0x1e0] sm:%s679] %v808
          %v810 = vld [vmem:[%s686 + $0x1e8] sm:%s679]
          %811 = vst [vmem:[%s687 + $0x1e8] sm:%s679] %v810
          %v812 = vld [vmem:[%s686 + $0x1f0] sm:%s679]
          %813 = vst [vmem:[%s687 + $0x1f0] sm:%s679] %v812
          %v814 = vld [vmem:[%s686 + $0x1f8] sm:%s679]
          %815 = vst [vmem:[%s687 + $0x1f8] sm:%s679] %v814
        $region52: #{reverse.4} parent=46 // loop_footer
          %s685 = sadd.s32 1, %s681
        $region53: #{reverse.4} parent=46 // loop_footer_branch
          %680 = sbr.rel target = $region49
        $region54: #{reverse.4} parent=46 // loop_exit
          _
      $region47: #{reverse.4} parent=38 // pred_fallthru
        _
    $region39: #{reverse.4} parent=1 // pred_fallthru
      _
    %956 = vnop

// kernel: _lambda_.1
$region0: #{_lambda_.1}
  #allocation0 [shape = 'u32[]', space=smem, size = 0x4, offset = 0x4, fixed_abs, tag = 'smem constant byte address 0x4 - core index']
  #allocation1 [shape = 'u32[72,128]{1,0:T(1,128)}', space=vmem, size = 0x9000, scoped, tag = 'internal scratch']
  %s0 = inlined_call_operand.vmem [shape: f32[32,160], index: 0, kind: input, shape index: {}]
  %s1 = inlined_call_operand.vmem [shape: f32[32,160], index: 1, kind: input, shape index: {}]
  %s2 = inlined_call_operand.vmem [shape: f32[32,160], index: 2, kind: input, shape index: {}]
  %s3 = inlined_call_operand.vmem [shape: f32[32,160], index: 3, kind: input, shape index: {}]
  %s4 = inlined_call_operand.vmem [shape: bf16[160,160], index: 4, kind: input, shape index: {}]
  %s5 = inlined_call_operand.vmem [shape: bf16[160,160], index: 5, kind: input, shape index: {}]
  %s6 = inlined_call_operand.vmem [shape: f32[32,160], index: 6, kind: output, shape index: {0}]
  %s7 = inlined_call_operand.vmem [shape: f32[32,160], index: 7, kind: output, shape index: {1}]
  %8 = xla_tuple %s6, %s7
  %s9 = sld [smem:[#allocation0]]
  $region42: #{_lambda_.1} parent=0
    _
  %s11 = ssub.s32 1, %s9
  %s12 = scalar_select 0, %s11, %s9
  // Predicated region
  $region2: #{_lambda_.1} parent=0 // pred_check
    _
  $region3: #{_lambda_.1} parent=0 // pred_check_branch
    %14 = sbr.rel (0) target = $region5
  $region4: #{_lambda_.1} parent=0 // pred_region
    _
  $region5: #{_lambda_.1} parent=0 // pred_fallthru
    _
  // Predicated region
  $region6: #{_lambda_.1} parent=0 // pred_check
    _
  $region7: #{_lambda_.1} parent=0 // pred_check_branch
    %16 = sbr.rel (0) target = $region9
  $region8: #{_lambda_.1} parent=0 // pred_region
    _
  $region9: #{_lambda_.1} parent=0 // pred_fallthru
    _
  // Predicated region
  $region10: #{_lambda_.1} parent=0 // pred_check
    _
  $region11: #{_lambda_.1} parent=0 // pred_check_branch
    %18 = sbr.rel (0) target = $region13
  $region12: #{_lambda_.1} parent=0 // pred_region
    _
  $region13: #{_lambda_.1} parent=0 // pred_fallthru
    _
  // Predicated region
  $region14: #{_lambda_.1} parent=0 // pred_check
    _
  $region15: #{_lambda_.1} parent=0 // pred_check_branch
    %20 = sbr.rel (0) target = $region17
  $region16: #{_lambda_.1} parent=0 // pred_region
    _
  $region17: #{_lambda_.1} parent=0 // pred_fallthru
    _
  // Predicated region
  $region18: #{_lambda_.1} parent=0 // pred_check
    _
  $region19: #{_lambda_.1} parent=0 // pred_check_branch
    %22 = sbr.rel (0) target = $region21
  $region20: #{_lambda_.1} parent=0 // pred_region
    _
  $region21: #{_lambda_.1} parent=0 // pred_fallthru
    _
  // Predicated region
  $region22: #{_lambda_.1} parent=0 // pred_check
    _
  $region23: #{_lambda_.1} parent=0 // pred_check_branch
    %24 = sbr.rel (0) target = $region25
  $region24: #{_lambda_.1} parent=0 // pred_region
    _
  $region25: #{_lambda_.1} parent=0 // pred_fallthru
    _
  %v26 = vld [vmem:[%s0] sm:$0xff]
  %v27 = vld [vmem:[%s0 + $0x8] sm:$0xff]
  %v28 = vld [vmem:[%s0 + $0x10] sm:$0xff]
  %v29 = vld [vmem:[%s0 + $0x18] sm:$0xff]
  %v30 = vld [vmem:[%s0 + $0x20] sm:$0xff]
  %v31 = vld [vmem:[%s0 + $0x28] sm:$0xff]
  %v32 = vld [vmem:[%s0 + $0x30] sm:$0xff]
  %v33 = vld [vmem:[%s0 + $0x38] sm:$0xff]
  %v34 = vld [vmem:[%s1] sm:$0xff]
  %v35 = vld [vmem:[%s1 + $0x8] sm:$0xff]
  %v36 = vld [vmem:[%s1 + $0x10] sm:$0xff]
  %v37 = vld [vmem:[%s1 + $0x18] sm:$0xff]
  %v38 = vld [vmem:[%s1 + $0x20] sm:$0xff]
  %v39 = vld [vmem:[%s1 + $0x28] sm:$0xff]
  %v40 = vld [vmem:[%s1 + $0x30] sm:$0xff]
  %v41 = vld [vmem:[%s1 + $0x38] sm:$0xff]
  %v42 = vld [vmem:[%s2] sm:$0xff]
  %v43 = vld [vmem:[%s2 + $0x8] sm:$0xff]
  %v44 = vld [vmem:[%s2 + $0x10] sm:$0xff]
  %v45 = vld [vmem:[%s2 + $0x18] sm:$0xff]
  %v46 = vld [vmem:[%s2 + $0x20] sm:$0xff]
  %v47 = vld [vmem:[%s2 + $0x28] sm:$0xff]
  %v48 = vld [vmem:[%s2 + $0x30] sm:$0xff]
  %v49 = vld [vmem:[%s2 + $0x38] sm:$0xff]
  %v50 = vld [vmem:[%s3] sm:$0xff]
  %v51 = vld [vmem:[%s3 + $0x8] sm:$0xff]
  %v52 = vld [vmem:[%s3 + $0x10] sm:$0xff]
  %v53 = vld [vmem:[%s3 + $0x18] sm:$0xff]
  %v54 = vld [vmem:[%s3 + $0x20] sm:$0xff]
  %v55 = vld [vmem:[%s3 + $0x28] sm:$0xff]
  %v56 = vld [vmem:[%s3 + $0x30] sm:$0xff]
  %v57 = vld [vmem:[%s3 + $0x38] sm:$0xff]
  %v58 = vmul.f32 %v26, %v42
  %v59 = vmul.f32 %v27, %v43
  %v60 = vmul.f32 %v28, %v44
  %v61 = vmul.f32 %v29, %v45
  %v62 = vmul.f32 %v30, %v46
  %v63 = vmul.f32 %v31, %v47
  %v64 = vmul.f32 %v32, %v48
  %v65 = vmul.f32 %v33, %v49
  %v66 = vmul.f32 %v34, %v50
  %v67 = vmul.f32 %v35, %v51
  %v68 = vmul.f32 %v36, %v52
  %v69 = vmul.f32 %v37, %v53
  %v70 = vmul.f32 %v38, %v54
  %v71 = vmul.f32 %v39, %v55
  %v72 = vmul.f32 %v40, %v56
  %v73 = vmul.f32 %v41, %v57
  %v74 = vsub.f32 %v58, %v66
  %v75 = vsub.f32 %v59, %v67
  %v76 = vsub.f32 %v60, %v68
  %v77 = vsub.f32 %v61, %v69
  %v78 = vsub.f32 %v62, %v70
  %v79 = vsub.f32 %v63, %v71
  %v80 = vsub.f32 %v64, %v72
  %v81 = vsub.f32 %v65, %v73
  %v82 = vmul.f32 %v26, %v50
  %v83 = vmul.f32 %v27, %v51
  %v84 = vmul.f32 %v28, %v52
  %v85 = vmul.f32 %v29, %v53
  %v86 = vmul.f32 %v30, %v54
  %v87 = vmul.f32 %v31, %v55
  %v88 = vmul.f32 %v32, %v56
  %v89 = vmul.f32 %v33, %v57
  %v90 = vmul.f32 %v34, %v42
  %v91 = vmul.f32 %v35, %v43
  %v92 = vmul.f32 %v36, %v44
  %v93 = vmul.f32 %v37, %v45
  %v94 = vmul.f32 %v38, %v46
  %v95 = vmul.f32 %v39, %v47
  %v96 = vmul.f32 %v40, %v48
  %v97 = vmul.f32 %v41, %v49
  %v98 = vadd.f32 %v82, %v90
  %v99 = vadd.f32 %v83, %v91
  %v100 = vadd.f32 %v84, %v92
  %v101 = vadd.f32 %v85, %v93
  %v102 = vadd.f32 %v86, %v94
  %v103 = vadd.f32 %v87, %v95
  %v104 = vadd.f32 %v88, %v96
  %v105 = vadd.f32 %v89, %v97
  %v106 = vpack.c.bf16 %v76, %v74
  %v107 = vpack.c.bf16 %v77, %v75
  %v108 = vpack.c.bf16 %v80, %v78
  %v109 = vpack.c.bf16 %v81, %v79
  %v110 = vpack.c.bf16 %v100, %v98
  %v111 = vpack.c.bf16 %v101, %v99
  %v112 = vpack.c.bf16 %v104, %v102
  %v113 = vpack.c.bf16 %v105, %v103
  %v114 = vld [vmem:[%s4] sm:$0xff]
  %v115 = vld [vmem:[%s4 + $0x8] sm:$0xff]
  %v116 = vld [vmem:[%s4 + $0x10] sm:$0xff]
  %v117 = vld [vmem:[%s4 + $0x18] sm:$0xff]
  %v118 = vld [vmem:[%s4 + $0x20] sm:$0xff]
  %v119 = vld [vmem:[%s4 + $0x28] sm:$0xff]
  %v120 = vld [vmem:[%s4 + $0x30] sm:$0xff]
  %v121 = vld [vmem:[%s4 + $0x38] sm:$0xff]
  %v122 = vld [vmem:[%s4 + $0x40] sm:$0xff]
  %v123 = vld [vmem:[%s4 + $0x48] sm:$0xff]
  %v124 = vld [vmem:[%s4 + $0x50] sm:$0xff]
  %v125 = vld [vmem:[%s4 + $0x58] sm:$0xff]
  %v126 = vld [vmem:[%s4 + $0x60] sm:$0xff]
  %v127 = vld [vmem:[%s4 + $0x68] sm:$0xff]
  %v128 = vld [vmem:[%s4 + $0x70] sm:$0xff]
  %v129 = vld [vmem:[%s4 + $0x78] sm:$0xff]
  %v130 = vld [vmem:[%s4 + $0x80] sm:$0xff]
  %v131 = vld [vmem:[%s4 + $0x88] sm:$0xff]
  %v132 = vld [vmem:[%s4 + $0x90] sm:$0xff]
  %v133 = vld [vmem:[%s4 + $0x98] sm:$0xff]
  %v134 = vld [vmem:[%s5] sm:$0xff]
  %v135 = vld [vmem:[%s5 + $0x8] sm:$0xff]
  %v136 = vld [vmem:[%s5 + $0x10] sm:$0xff]
  %v137 = vld [vmem:[%s5 + $0x18] sm:$0xff]
  %v138 = vld [vmem:[%s5 + $0x20] sm:$0xff]
  %v139 = vld [vmem:[%s5 + $0x28] sm:$0xff]
  %v140 = vld [vmem:[%s5 + $0x30] sm:$0xff]
  %v141 = vld [vmem:[%s5 + $0x38] sm:$0xff]
  %v142 = vld [vmem:[%s5 + $0x40] sm:$0xff]
  %v143 = vld [vmem:[%s5 + $0x48] sm:$0xff]
  %v144 = vld [vmem:[%s5 + $0x50] sm:$0xff]
  %v145 = vld [vmem:[%s5 + $0x58] sm:$0xff]
  %v146 = vld [vmem:[%s5 + $0x60] sm:$0xff]
  %v147 = vld [vmem:[%s5 + $0x68] sm:$0xff]
  %v148 = vld [vmem:[%s5 + $0x70] sm:$0xff]
  %v149 = vld [vmem:[%s5 + $0x78] sm:$0xff]
  %v150 = vld [vmem:[%s5 + $0x80] sm:$0xff]
  %v151 = vld [vmem:[%s5 + $0x88] sm:$0xff]
  %v152 = vld [vmem:[%s5 + $0x90] sm:$0xff]
  %v153 = vld [vmem:[%s5 + $0x98] sm:$0xff]
  %v174 = vunpack.c.l.b16 %v114
  %v175 = vunpack.c.h.b16 %v114
  %v176 = vunpack.c.l.b16 %v115
  %v177 = vunpack.c.h.b16 %v115
  %v178 = vunpack.c.l.b16 %v116
  %v179 = vunpack.c.h.b16 %v116
  %v180 = vunpack.c.l.b16 %v117
  %v181 = vunpack.c.h.b16 %v117
  %v182 = vunpack.c.l.b16 %v118
  %v183 = vunpack.c.h.b16 %v118
  %v184 = vunpack.c.l.b16 %v119
  %v185 = vunpack.c.h.b16 %v119
  %v186 = vunpack.c.l.b16 %v120
  %v187 = vunpack.c.h.b16 %v120
  %v188 = vunpack.c.l.b16 %v121
  %v189 = vunpack.c.h.b16 %v121
  %v190 = vunpack.c.l.b16 %v122
  %v191 = vunpack.c.h.b16 %v122
  %v192 = vunpack.c.l.b16 %v123
  %v193 = vunpack.c.h.b16 %v123
  %v194 = vunpack.c.l.b16 %v124
  %v195 = vunpack.c.h.b16 %v124
  %v196 = vunpack.c.l.b16 %v125
  %v197 = vunpack.c.h.b16 %v125
  %v198 = vunpack.c.l.b16 %v126
  %v199 = vunpack.c.h.b16 %v126
  %v200 = vunpack.c.l.b16 %v127
  %v201 = vunpack.c.h.b16 %v127
  %v202 = vunpack.c.l.b16 %v128
  %v203 = vunpack.c.h.b16 %v128
  %v204 = vunpack.c.l.b16 %v129
  %v205 = vunpack.c.h.b16 %v129
  %v206 = vunpack.c.l.b16 %v130
  %v207 = vunpack.c.h.b16 %v130
  %v208 = vunpack.c.l.b16 %v131
  %v209 = vunpack.c.h.b16 %v131
  %v210 = vunpack.c.l.b16 %v132
  %v211 = vunpack.c.h.b16 %v132
  %v212 = vunpack.c.l.b16 %v133
  %v213 = vunpack.c.h.b16 %v133
  %v214 = vpack.c.b16 %v176, %v174
  %v215 = vpack.c.b16 %v177, %v175
  %v216 = vpack.c.b16 %v180, %v178
  %v217 = vpack.c.b16 %v181, %v179
  %v218 = vpack.c.b16 %v184, %v182
  %v219 = vpack.c.b16 %v185, %v183
  %v220 = vpack.c.b16 %v188, %v186
  %v221 = vpack.c.b16 %v189, %v187
  %v222 = vpack.c.b16 %v192, %v190
  %v223 = vpack.c.b16 %v193, %v191
  %v224 = vpack.c.b16 %v196, %v194
  %v225 = vpack.c.b16 %v197, %v195
  %v226 = vpack.c.b16 %v200, %v198
  %v227 = vpack.c.b16 %v201, %v199
  %v228 = vpack.c.b16 %v204, %v202
  %v229 = vpack.c.b16 %v205, %v203
  %v230 = vpack.c.b16 %v208, %v206
  %v231 = vpack.c.b16 %v209, %v207
  %v232 = vpack.c.b16 %v212, %v210
  %v233 = vpack.c.b16 %v213, %v211
  %vm254 = vcmask 261120
  %v256 = vsel %vm254, %v107, 0
  %v259 = vsel %vm254, %v109, 0
  %261 = vmatpush.bf16.msra.mxu0 %v228
  %262 = vmatpush.bf16.msra.mxu0 %v226
  %263 = vmatpush.bf16.msra.mxu0 %v224
  %264 = vmatpush.bf16.msra.mxu0 %v222
  %265 = vmatpush.bf16.msra.mxu0 %v220
  %266 = vmatpush.bf16.msra.mxu0 %v218
  %267 = vmatpush.bf16.msra.mxu0 %v216
  %268 = vmatpush.bf16.msra.mxu0 %v214
  %269 = vmatmul.bf16.gmra.mxu0 %v106
  %v270 = vpop.f32.mrf.mxu0
  %v271 = vadd.f32 0.0, %v270
  %v272 = vpop.f32.mrf.mxu0
  %v273 = vadd.f32 0.0, %v272
  %274 = vmatmul.bf16.gmra.mxu0 %v108
  %v275 = vpop.f32.mrf.mxu0
  %v276 = vadd.f32 0.0, %v275
  %v277 = vpop.f32.mrf.mxu0
  %v278 = vadd.f32 0.0, %v277
  %279 = vdwg.mxu0
  %280 = vmatpush.bf16.msra.mxu0 0
  %281 = vmatpush.bf16.msra.mxu0 0
  %282 = vmatpush.bf16.msra.mxu0 0
  %283 = vmatpush.bf16.msra.mxu0 0
  %284 = vmatpush.bf16.msra.mxu0 0
  %285 = vmatpush.bf16.msra.mxu0 0
  %286 = vmatpush.bf16.msra.mxu0 %v232
  %287 = vmatpush.bf16.msra.mxu0 %v230
  %288 = vmatmul.bf16.gmra.mxu0 %v256
  %v289 = vpop.f32.mrf.mxu0
  %v290 = vadd.f32 %v271, %v289
  %v291 = vpop.f32.mrf.mxu0
  %v292 = vadd.f32 %v273, %v291
  %293 = vmatmul.bf16.gmra.mxu0 %v259
  %v294 = vpop.f32.mrf.mxu0
  %v295 = vadd.f32 %v276, %v294
  %v296 = vpop.f32.mrf.mxu0
  %v297 = vadd.f32 %v278, %v296
  %298 = vdwg.mxu0
  %299 = vmatpush.bf16.msra.mxu0 %v229
  %300 = vmatpush.bf16.msra.mxu0 %v227
  %301 = vmatpush.bf16.msra.mxu0 %v225
  %302 = vmatpush.bf16.msra.mxu0 %v223
  %303 = vmatpush.bf16.msra.mxu0 %v221
  %304 = vmatpush.bf16.msra.mxu0 %v219
  %305 = vmatpush.bf16.msra.mxu0 %v217
  %306 = vmatpush.bf16.msra.mxu0 %v215
  %307 = vmatmul.bf16.gmra.mxu0 %v106
  %v308 = vpop.f32.mrf.mxu0
  %v309 = vadd.f32 0.0, %v308
  %v310 = vpop.f32.mrf.mxu0
  %v311 = vadd.f32 0.0, %v310
  %312 = vmatmul.bf16.gmra.mxu0 %v108
  %v313 = vpop.f32.mrf.mxu0
  %v314 = vadd.f32 0.0, %v313
  %v315 = vpop.f32.mrf.mxu0
  %v316 = vadd.f32 0.0, %v315
  %317 = vdwg.mxu0
  %318 = vmatpush.bf16.msra.mxu0 0
  %319 = vmatpush.bf16.msra.mxu0 0
  %320 = vmatpush.bf16.msra.mxu0 0
  %321 = vmatpush.bf16.msra.mxu0 0
  %322 = vmatpush.bf16.msra.mxu0 0
  %323 = vmatpush.bf16.msra.mxu0 0
  %324 = vmatpush.bf16.msra.mxu0 %v233
  %325 = vmatpush.bf16.msra.mxu0 %v231
  %326 = vmatmul.bf16.gmra.mxu0 %v256
  %v327 = vpop.f32.mrf.mxu0
  %v328 = vadd.f32 %v309, %v327
  %v329 = vpop.f32.mrf.mxu0
  %v330 = vadd.f32 %v311, %v329
  %331 = vmatmul.bf16.gmra.mxu0 %v259
  %v332 = vpop.f32.mrf.mxu0
  %v333 = vadd.f32 %v314, %v332
  %v334 = vpop.f32.mrf.mxu0
  %v335 = vadd.f32 %v316, %v334
  %336 = vdwg.mxu0
  %v357 = vunpack.c.l.b16 %v134
  %v358 = vunpack.c.h.b16 %v134
  %v359 = vunpack.c.l.b16 %v135
  %v360 = vunpack.c.h.b16 %v135
  %v361 = vunpack.c.l.b16 %v136
  %v362 = vunpack.c.h.b16 %v136
  %v363 = vunpack.c.l.b16 %v137
  %v364 = vunpack.c.h.b16 %v137
  %v365 = vunpack.c.l.b16 %v138
  %v366 = vunpack.c.h.b16 %v138
  %v367 = vunpack.c.l.b16 %v139
  %v368 = vunpack.c.h.b16 %v139
  %v369 = vunpack.c.l.b16 %v140
  %v370 = vunpack.c.h.b16 %v140
  %v371 = vunpack.c.l.b16 %v141
  %v372 = vunpack.c.h.b16 %v141
  %v373 = vunpack.c.l.b16 %v142
  %v374 = vunpack.c.h.b16 %v142
  %v375 = vunpack.c.l.b16 %v143
  %v376 = vunpack.c.h.b16 %v143
  %v377 = vunpack.c.l.b16 %v144
  %v378 = vunpack.c.h.b16 %v144
  %v379 = vunpack.c.l.b16 %v145
  %v380 = vunpack.c.h.b16 %v145
  %v381 = vunpack.c.l.b16 %v146
  %v382 = vunpack.c.h.b16 %v146
  %v383 = vunpack.c.l.b16 %v147
  %v384 = vunpack.c.h.b16 %v147
  %v385 = vunpack.c.l.b16 %v148
  %v386 = vunpack.c.h.b16 %v148
  %v387 = vunpack.c.l.b16 %v149
  %v388 = vunpack.c.h.b16 %v149
  %v389 = vunpack.c.l.b16 %v150
  %v390 = vunpack.c.h.b16 %v150
  %v391 = vunpack.c.l.b16 %v151
  %v392 = vunpack.c.h.b16 %v151
  %v393 = vunpack.c.l.b16 %v152
  %v394 = vunpack.c.h.b16 %v152
  %v395 = vunpack.c.l.b16 %v153
  %v396 = vunpack.c.h.b16 %v153
  %v397 = vpack.c.b16 %v359, %v357
  %v398 = vpack.c.b16 %v360, %v358
  %v399 = vpack.c.b16 %v363, %v361
  %v400 = vpack.c.b16 %v364, %v362
  %v401 = vpack.c.b16 %v367, %v365
  %v402 = vpack.c.b16 %v368, %v366
  %v403 = vpack.c.b16 %v371, %v369
  %v404 = vpack.c.b16 %v372, %v370
  %v405 = vpack.c.b16 %v375, %v373
  %v406 = vpack.c.b16 %v376, %v374
  %v407 = vpack.c.b16 %v379, %v377
  %v408 = vpack.c.b16 %v380, %v378
  %v409 = vpack.c.b16 %v383, %v381
  %v410 = vpack.c.b16 %v384, %v382
  %v411 = vpack.c.b16 %v387, %v385
  %v412 = vpack.c.b16 %v388, %v386
  %v413 = vpack.c.b16 %v391, %v389
  %v414 = vpack.c.b16 %v392, %v390
  %v415 = vpack.c.b16 %v395, %v393
  %v416 = vpack.c.b16 %v396, %v394
  %v438 = vsel %vm254, %v111, 0
  %v441 = vsel %vm254, %v113, 0
  %443 = vmatpush.bf16.msra.mxu0 %v411
  %444 = vmatpush.bf16.msra.mxu0 %v409
  %445 = vmatpush.bf16.msra.mxu0 %v407
  %446 = vmatpush.bf16.msra.mxu0 %v405
  %447 = vmatpush.bf16.msra.mxu0 %v403
  %448 = vmatpush.bf16.msra.mxu0 %v401
  %449 = vmatpush.bf16.msra.mxu0 %v399
  %450 = vmatpush.bf16.msra.mxu0 %v397
  %451 = vmatmul.bf16.gmra.mxu0 %v110
  %v452 = vpop.f32.mrf.mxu0
  %v453 = vadd.f32 0.0, %v452
  %v454 = vpop.f32.mrf.mxu0
  %v455 = vadd.f32 0.0, %v454
  %456 = vmatmul.bf16.gmra.mxu0 %v112
  %v457 = vpop.f32.mrf.mxu0
  %v458 = vadd.f32 0.0, %v457
  %v459 = vpop.f32.mrf.mxu0
  %v460 = vadd.f32 0.0, %v459
  %461 = vdwg.mxu0
  %462 = vmatpush.bf16.msra.mxu0 0
  %463 = vmatpush.bf16.msra.mxu0 0
  %464 = vmatpush.bf16.msra.mxu0 0
  %465 = vmatpush.bf16.msra.mxu0 0
  %466 = vmatpush.bf16.msra.mxu0 0
  %467 = vmatpush.bf16.msra.mxu0 0
  %468 = vmatpush.bf16.msra.mxu0 %v415
  %469 = vmatpush.bf16.msra.mxu0 %v413
  %470 = vmatmul.bf16.gmra.mxu0 %v438
  %v471 = vpop.f32.mrf.mxu0
  %v472 = vadd.f32 %v453, %v471
  %v473 = vpop.f32.mrf.mxu0
  %v474 = vadd.f32 %v455, %v473
  %475 = vmatmul.bf16.gmra.mxu0 %v441
  %v476 = vpop.f32.mrf.mxu0
  %v477 = vadd.f32 %v458, %v476
  %v478 = vpop.f32.mrf.mxu0
  %v479 = vadd.f32 %v460, %v478
  %480 = vdwg.mxu0
  %481 = vmatpush.bf16.msra.mxu0 %v412
  %482 = vmatpush.bf16.msra.mxu0 %v410
  %483 = vmatpush.bf16.msra.mxu0 %v408
  %484 = vmatpush.bf16.msra.mxu0 %v406
  %485 = vmatpush.bf16.msra.mxu0 %v404
  %486 = vmatpush.bf16.msra.mxu0 %v402
  %487 = vmatpush.bf16.msra.mxu0 %v400
  %488 = vmatpush.bf16.msra.mxu0 %v398
  %489 = vmatmul.bf16.gmra.mxu0 %v110
  %v490 = vpop.f32.mrf.mxu0
  %v491 = vadd.f32 0.0, %v490
  %v492 = vpop.f32.mrf.mxu0
  %v493 = vadd.f32 0.0, %v492
  %494 = vmatmul.bf16.gmra.mxu0 %v112
  %v495 = vpop.f32.mrf.mxu0
  %v496 = vadd.f32 0.0, %v495
  %v497 = vpop.f32.mrf.mxu0
  %v498 = vadd.f32 0.0, %v497
  %499 = vdwg.mxu0
  %500 = vmatpush.bf16.msra.mxu0 0
  %501 = vmatpush.bf16.msra.mxu0 0
  %502 = vmatpush.bf16.msra.mxu0 0
  %503 = vmatpush.bf16.msra.mxu0 0
  %504 = vmatpush.bf16.msra.mxu0 0
  %505 = vmatpush.bf16.msra.mxu0 0
  %506 = vmatpush.bf16.msra.mxu0 %v416
  %507 = vmatpush.bf16.msra.mxu0 %v414
  %508 = vmatmul.bf16.gmra.mxu0 %v438
  %v509 = vpop.f32.mrf.mxu0
  %v510 = vadd.f32 %v491, %v509
  %v511 = vpop.f32.mrf.mxu0
  %v512 = vadd.f32 %v493, %v511
  %513 = vmatmul.bf16.gmra.mxu0 %v441
  %v514 = vpop.f32.mrf.mxu0
  %v515 = vadd.f32 %v496, %v514
  %v516 = vpop.f32.mrf.mxu0
  %v517 = vadd.f32 %v498, %v516
  %518 = vdwg.mxu0
  %v519 = vsub.f32 %v290, %v472
  %v520 = vsub.f32 %v328, %v510
  %v521 = vsub.f32 %v292, %v474
  %v522 = vsub.f32 %v330, %v512
  %v523 = vsub.f32 %v295, %v477
  %v524 = vsub.f32 %v333, %v515
  %v525 = vsub.f32 %v297, %v479
  %v526 = vsub.f32 %v335, %v517
  %527 = vmatpush.bf16.msra.mxu0 %v228
  %528 = vmatpush.bf16.msra.mxu0 %v226
  %529 = vmatpush.bf16.msra.mxu0 %v224
  %530 = vmatpush.bf16.msra.mxu0 %v222
  %531 = vmatpush.bf16.msra.mxu0 %v220
  %532 = vmatpush.bf16.msra.mxu0 %v218
  %533 = vmatpush.bf16.msra.mxu0 %v216
  %534 = vmatpush.bf16.msra.mxu0 %v214
  %535 = vmatmul.bf16.gmra.mxu0 %v110
  %v536 = vpop.f32.mrf.mxu0
  %v537 = vadd.f32 0.0, %v536
  %v538 = vpop.f32.mrf.mxu0
  %v539 = vadd.f32 0.0, %v538
  %540 = vmatmul.bf16.gmra.mxu0 %v112
  %v541 = vpop.f32.mrf.mxu0
  %v542 = vadd.f32 0.0, %v541
  %v543 = vpop.f32.mrf.mxu0
  %v544 = vadd.f32 0.0, %v543
  %545 = vdwg.mxu0
  %546 = vmatpush.bf16.msra.mxu0 0
  %547 = vmatpush.bf16.msra.mxu0 0
  %548 = vmatpush.bf16.msra.mxu0 0
  %549 = vmatpush.bf16.msra.mxu0 0
  %550 = vmatpush.bf16.msra.mxu0 0
  %551 = vmatpush.bf16.msra.mxu0 0
  %552 = vmatpush.bf16.msra.mxu0 %v232
  %553 = vmatpush.bf16.msra.mxu0 %v230
  %554 = vmatmul.bf16.gmra.mxu0 %v438
  %v555 = vpop.f32.mrf.mxu0
  %v556 = vadd.f32 %v537, %v555
  %v557 = vpop.f32.mrf.mxu0
  %v558 = vadd.f32 %v539, %v557
  %559 = vmatmul.bf16.gmra.mxu0 %v441
  %v560 = vpop.f32.mrf.mxu0
  %v561 = vadd.f32 %v542, %v560
  %v562 = vpop.f32.mrf.mxu0
  %v563 = vadd.f32 %v544, %v562
  %564 = vdwg.mxu0
  %565 = vmatpush.bf16.msra.mxu0 %v229
  %566 = vmatpush.bf16.msra.mxu0 %v227
  %567 = vmatpush.bf16.msra.mxu0 %v225
  %568 = vmatpush.bf16.msra.mxu0 %v223
  %569 = vmatpush.bf16.msra.mxu0 %v221
  %570 = vmatpush.bf16.msra.mxu0 %v219
  %571 = vmatpush.bf16.msra.mxu0 %v217
  %572 = vmatpush.bf16.msra.mxu0 %v215
  %573 = vmatmul.bf16.gmra.mxu0 %v110
  %v574 = vpop.f32.mrf.mxu0
  %v575 = vadd.f32 0.0, %v574
  %v576 = vpop.f32.mrf.mxu0
  %v577 = vadd.f32 0.0, %v576
  %578 = vmatmul.bf16.gmra.mxu0 %v112
  %v579 = vpop.f32.mrf.mxu0
  %v580 = vadd.f32 0.0, %v579
  %v581 = vpop.f32.mrf.mxu0
  %v582 = vadd.f32 0.0, %v581
  %583 = vdwg.mxu0
  %584 = vmatpush.bf16.msra.mxu0 0
  %585 = vmatpush.bf16.msra.mxu0 0
  %586 = vmatpush.bf16.msra.mxu0 0
  %587 = vmatpush.bf16.msra.mxu0 0
  %588 = vmatpush.bf16.msra.mxu0 0
  %589 = vmatpush.bf16.msra.mxu0 0
  %590 = vmatpush.bf16.msra.mxu0 %v233
  %591 = vmatpush.bf16.msra.mxu0 %v231
  %592 = vmatmul.bf16.gmra.mxu0 %v438
  %v593 = vpop.f32.mrf.mxu0
  %v594 = vadd.f32 %v575, %v593
  %v595 = vpop.f32.mrf.mxu0
  %v596 = vadd.f32 %v577, %v595
  %597 = vmatmul.bf16.gmra.mxu0 %v441
  %v598 = vpop.f32.mrf.mxu0
  %v599 = vadd.f32 %v580, %v598
  %v600 = vpop.f32.mrf.mxu0
  %v601 = vadd.f32 %v582, %v600
  %602 = vdwg.mxu0
  %603 = vmatpush.bf16.msra.mxu0 %v411
  %604 = vmatpush.bf16.msra.mxu0 %v409
  %605 = vmatpush.bf16.msra.mxu0 %v407
  %606 = vmatpush.bf16.msra.mxu0 %v405
  %607 = vmatpush.bf16.msra.mxu0 %v403
  %608 = vmatpush.bf16.msra.mxu0 %v401
  %609 = vmatpush.bf16.msra.mxu0 %v399
  %610 = vmatpush.bf16.msra.mxu0 %v397
  %611 = vmatmul.bf16.gmra.mxu0 %v106
  %v612 = vpop.f32.mrf.mxu0
  %v613 = vadd.f32 %v556, %v612
  %v614 = vpop.f32.mrf.mxu0
  %v615 = vadd.f32 %v558, %v614
  %616 = vmatmul.bf16.gmra.mxu0 %v108
  %v617 = vpop.f32.mrf.mxu0
  %v618 = vadd.f32 %v561, %v617
  %v619 = vpop.f32.mrf.mxu0
  %v620 = vadd.f32 %v563, %v619
  %621 = vdwg.mxu0
  %622 = vmatpush.bf16.msra.mxu0 0
  %623 = vmatpush.bf16.msra.mxu0 0
  %624 = vmatpush.bf16.msra.mxu0 0
  %625 = vmatpush.bf16.msra.mxu0 0
  %626 = vmatpush.bf16.msra.mxu0 0
  %627 = vmatpush.bf16.msra.mxu0 0
  %628 = vmatpush.bf16.msra.mxu0 %v415
  %629 = vmatpush.bf16.msra.mxu0 %v413
  %630 = vmatmul.bf16.gmra.mxu0 %v256
  %v631 = vpop.f32.mrf.mxu0
  %v632 = vadd.f32 %v613, %v631
  %v633 = vpop.f32.mrf.mxu0
  %v634 = vadd.f32 %v615, %v633
  %635 = vmatmul.bf16.gmra.mxu0 %v259
  %v636 = vpop.f32.mrf.mxu0
  %v637 = vadd.f32 %v618, %v636
  %v638 = vpop.f32.mrf.mxu0
  %v639 = vadd.f32 %v620, %v638
  %640 = vdwg.mxu0
  %641 = vmatpush.bf16.msra.mxu0 %v412
  %642 = vmatpush.bf16.msra.mxu0 %v410
  %643 = vmatpush.bf16.msra.mxu0 %v408
  %644 = vmatpush.bf16.msra.mxu0 %v406
  %645 = vmatpush.bf16.msra.mxu0 %v404
  %646 = vmatpush.bf16.msra.mxu0 %v402
  %647 = vmatpush.bf16.msra.mxu0 %v400
  %648 = vmatpush.bf16.msra.mxu0 %v398
  %649 = vmatmul.bf16.gmra.mxu0 %v106
  %v650 = vpop.f32.mrf.mxu0
  %v651 = vadd.f32 %v594, %v650
  %v652 = vpop.f32.mrf.mxu0
  %v653 = vadd.f32 %v596, %v652
  %654 = vmatmul.bf16.gmra.mxu0 %v108
  %v655 = vpop.f32.mrf.mxu0
  %v656 = vadd.f32 %v599, %v655
  %v657 = vpop.f32.mrf.mxu0
  %v658 = vadd.f32 %v601, %v657
  %659 = vdwg.mxu0
  %660 = vmatpush.bf16.msra.mxu0 0
  %661 = vmatpush.bf16.msra.mxu0 0
  %662 = vmatpush.bf16.msra.mxu0 0
  %663 = vmatpush.bf16.msra.mxu0 0
  %664 = vmatpush.bf16.msra.mxu0 0
  %665 = vmatpush.bf16.msra.mxu0 0
  %666 = vmatpush.bf16.msra.mxu0 %v416
  %667 = vmatpush.bf16.msra.mxu0 %v414
  %668 = vmatmul.bf16.gmra.mxu0 %v256
  %v669 = vpop.f32.mrf.mxu0
  %v670 = vadd.f32 %v651, %v669
  %v671 = vpop.f32.mrf.mxu0
  %v672 = vadd.f32 %v653, %v671
  %673 = vmatmul.bf16.gmra.mxu0 %v259
  %v674 = vpop.f32.mrf.mxu0
  %v675 = vadd.f32 %v656, %v674
  %v676 = vpop.f32.mrf.mxu0
  %v677 = vadd.f32 %v658, %v676
  %678 = vdwg.mxu0
  %vm679 = vcmp.gt.f32.partialorder %v519, 0.01
  %vm680 = vcmp.gt.f32.partialorder %v520, 0.01
  %vm681 = vcmp.gt.f32.partialorder %v521, 0.01
  %vm682 = vcmp.gt.f32.partialorder %v522, 0.01
  %vm683 = vcmp.gt.f32.partialorder %v523, 0.01
  %vm684 = vcmp.gt.f32.partialorder %v524, 0.01
  %vm685 = vcmp.gt.f32.partialorder %v525, 0.01
  %vm686 = vcmp.gt.f32.partialorder %v526, 0.01
  %v687 = vsub.f32 %v519, 0.01
  %v688 = vsub.f32 %v520, 0.01
  %v689 = vsub.f32 %v521, 0.01
  %v690 = vsub.f32 %v522, 0.01
  %v691 = vsub.f32 %v523, 0.01
  %v692 = vsub.f32 %v524, 0.01
  %v693 = vsub.f32 %v525, 0.01
  %v694 = vsub.f32 %v526, 0.01
  %vm695 = vcmp.lt.f32.partialorder %v519, -0.01
  %vm696 = vcmp.lt.f32.partialorder %v520, -0.01
  %vm697 = vcmp.lt.f32.partialorder %v521, -0.01
  %vm698 = vcmp.lt.f32.partialorder %v522, -0.01
  %vm699 = vcmp.lt.f32.partialorder %v523, -0.01
  %vm700 = vcmp.lt.f32.partialorder %v524, -0.01
  %vm701 = vcmp.lt.f32.partialorder %v525, -0.01
  %vm702 = vcmp.lt.f32.partialorder %v526, -0.01
  %v703 = vadd.f32 %v519, 0.01
  %v704 = vadd.f32 %v520, 0.01
  %v705 = vadd.f32 %v521, 0.01
  %v706 = vadd.f32 %v522, 0.01
  %v707 = vadd.f32 %v523, 0.01
  %v708 = vadd.f32 %v524, 0.01
  %v709 = vadd.f32 %v525, 0.01
  %v710 = vadd.f32 %v526, 0.01
  %v711 = vsel %vm695, %v703, 0.0
  %v712 = vsel %vm696, %v704, 0.0
  %v713 = vsel %vm697, %v705, 0.0
  %v714 = vsel %vm698, %v706, 0.0
  %v715 = vsel %vm699, %v707, 0.0
  %v716 = vsel %vm700, %v708, 0.0
  %v717 = vsel %vm701, %v709, 0.0
  %v718 = vsel %vm702, %v710, 0.0
  %v719 = vsel %vm679, %v687, %v711
  %v720 = vsel %vm680, %v688, %v712
  %v721 = vsel %vm681, %v689, %v713
  %v722 = vsel %vm682, %v690, %v714
  %v723 = vsel %vm683, %v691, %v715
  %v724 = vsel %vm684, %v692, %v716
  %v725 = vsel %vm685, %v693, %v717
  %v726 = vsel %vm686, %v694, %v718
  %727 = vst [vmem:[%s6] sm:$0xff] %v719
  %728 = vst.msk [vmem:[%s6 + $0x8] sm:$0xff] %vm254, %v720
  %729 = vst [vmem:[%s6 + $0x10] sm:$0xff] %v721
  %730 = vst.msk [vmem:[%s6 + $0x18] sm:$0xff] %vm254, %v722
  %731 = vst [vmem:[%s6 + $0x20] sm:$0xff] %v723
  %732 = vst.msk [vmem:[%s6 + $0x28] sm:$0xff] %vm254, %v724
  %733 = vst [vmem:[%s6 + $0x30] sm:$0xff] %v725
  %734 = vst.msk [vmem:[%s6 + $0x38] sm:$0xff] %vm254, %v726
  %vm735 = vcmp.gt.f32.partialorder %v632, 0.01
  %vm736 = vcmp.gt.f32.partialorder %v670, 0.01
  %vm737 = vcmp.gt.f32.partialorder %v634, 0.01
  %vm738 = vcmp.gt.f32.partialorder %v672, 0.01
  %vm739 = vcmp.gt.f32.partialorder %v637, 0.01
  %vm740 = vcmp.gt.f32.partialorder %v675, 0.01
  %vm741 = vcmp.gt.f32.partialorder %v639, 0.01
  %vm742 = vcmp.gt.f32.partialorder %v677, 0.01
  %v743 = vsub.f32 %v632, 0.01
  %v744 = vsub.f32 %v670, 0.01
  %v745 = vsub.f32 %v634, 0.01
  %v746 = vsub.f32 %v672, 0.01
  %v747 = vsub.f32 %v637, 0.01
  %v748 = vsub.f32 %v675, 0.01
  %v749 = vsub.f32 %v639, 0.01
  %v750 = vsub.f32 %v677, 0.01
  %vm751 = vcmp.lt.f32.partialorder %v632, -0.01
  %vm752 = vcmp.lt.f32.partialorder %v670, -0.01
  %vm753 = vcmp.lt.f32.partialorder %v634, -0.01
  %vm754 = vcmp.lt.f32.partialorder %v672, -0.01
  %vm755 = vcmp.lt.f32.partialorder %v637, -0.01
  %vm756 = vcmp.lt.f32.partialorder %v675, -0.01
  %vm757 = vcmp.lt.f32.partialorder %v639, -0.01
  %vm758 = vcmp.lt.f32.partialorder %v677, -0.01
  %v759 = vadd.f32 %v632, 0.01
  %v760 = vadd.f32 %v670, 0.01
  %v761 = vadd.f32 %v634, 0.01
  %v762 = vadd.f32 %v672, 0.01
  %v763 = vadd.f32 %v637, 0.01
  %v764 = vadd.f32 %v675, 0.01
  %v765 = vadd.f32 %v639, 0.01
  %v766 = vadd.f32 %v677, 0.01
  %v767 = vsel %vm751, %v759, 0.0
  %v768 = vsel %vm752, %v760, 0.0
  %v769 = vsel %vm753, %v761, 0.0
  %v770 = vsel %vm754, %v762, 0.0
  %v771 = vsel %vm755, %v763, 0.0
  %v772 = vsel %vm756, %v764, 0.0
  %v773 = vsel %vm757, %v765, 0.0
  %v774 = vsel %vm758, %v766, 0.0
  %v775 = vsel %vm735, %v743, %v767
  %v776 = vsel %vm736, %v744, %v768
  %v777 = vsel %vm737, %v745, %v769
  %v778 = vsel %vm738, %v746, %v770
  %v779 = vsel %vm739, %v747, %v771
  %v780 = vsel %vm740, %v748, %v772
  %v781 = vsel %vm741, %v749, %v773
  %v782 = vsel %vm742, %v750, %v774
  %783 = vst [vmem:[%s7] sm:$0xff] %v775
  %784 = vst.msk [vmem:[%s7 + $0x8] sm:$0xff] %vm254, %v776
  %785 = vst [vmem:[%s7 + $0x10] sm:$0xff] %v777
  %786 = vst.msk [vmem:[%s7 + $0x18] sm:$0xff] %vm254, %v778
  %787 = vst [vmem:[%s7 + $0x20] sm:$0xff] %v779
  %788 = vst.msk [vmem:[%s7 + $0x28] sm:$0xff] %vm254, %v780
  %789 = vst [vmem:[%s7 + $0x30] sm:$0xff] %v781
  %790 = vst.msk [vmem:[%s7 + $0x38] sm:$0xff] %vm254, %v782
  // Predicated region
  $region26: #{_lambda_.1} parent=0 // pred_check
    _
  $region27: #{_lambda_.1} parent=0 // pred_check_branch
    %792 = sbr.rel (0) target = $region29
  $region28: #{_lambda_.1} parent=0 // pred_region
    _
  $region29: #{_lambda_.1} parent=0 // pred_fallthru
    _
  // Predicated region
  $region30: #{_lambda_.1} parent=0 // pred_check
    _
  $region31: #{_lambda_.1} parent=0 // pred_check_branch
    %794 = sbr.rel (0) target = $region33
  $region32: #{_lambda_.1} parent=0 // pred_region
    _
  $region33: #{_lambda_.1} parent=0 // pred_fallthru
    _
  // Predicated region
  $region34: #{_lambda_.1} parent=0 // pred_check
    _
  $region35: #{_lambda_.1} parent=0 // pred_check_branch
    %796 = sbr.rel (0) target = $region37
  $region36: #{_lambda_.1} parent=0 // pred_region
    _
  $region37: #{_lambda_.1} parent=0 // pred_fallthru
    _
  // Predicated region
  $region38: #{_lambda_.1} parent=0 // pred_check
    _
  $region39: #{_lambda_.1} parent=0 // pred_check_branch
    %798 = sbr.rel (0) target = $region41
  $region40: #{_lambda_.1} parent=0 // pred_region
    _
  $region41: #{_lambda_.1} parent=0 // pred_fallthru
    _

</llo_original>
